<compile_context>
chip_gen: v5e
topology: v5e:2x2
jax: 0.10.0
libtpu: 0.0.40
codegen_flags: <defaults>
</compile_context>

<pallas_src>
import functools
import math

import jax
import jax.numpy as jnp
from jax import lax
from jax.experimental import pallas as pl
from jax.experimental.pallas import tpu as pltpu


_STATIC_UNROLL_MAX_STEPS = 32   # full unroll below this; bounded fori_loop above


# ------------------------------ Fused kernel ---------------------------------

def fused_lstm_kernel(*refs, seq_len, batch_pad, hidden_size, num_layers):
    S, Bp, H = seq_len, batch_pad, hidden_size

    x_ref = refs[0]                                        # (S*Bp, D)
    layer_refs = refs[1:1 + 3 * num_layers]                # per layer: wih, whh, bias
    wlin_ref = refs[1 + 3 * num_layers]                    # (1, H)   f32
    blin_ref = refs[2 + 3 * num_layers]                    # (1, 1)   f32
    o_ref = refs[3 + 3 * num_layers]                       # (S*Bp, 1) f32
    seq_ref, gx_ref = refs[4 + 3 * num_layers:]            # VMEM scratch

    def lstm_step(gx_t, h, c, w_hh):
        # gx_t already holds x_t @ W_ih + (b_ih + b_hh), in f32.
        gates = gx_t + jnp.dot(h.astype(w_hh.dtype), w_hh,
                               preferred_element_type=jnp.float32)   # (Bp, 4H) f32
        # Fused activations: one sigmoid + one tanh over the full 4H block;
        # gate slabs (i, f, o from sig; g from tanh) are lane slices.
        sig = jax.nn.sigmoid(gates)
        th = jnp.tanh(gates)
        i = sig[:, 0 * H:1 * H]
        f = sig[:, 1 * H:2 * H]
        g = th[:, 2 * H:3 * H]
        o = sig[:, 3 * H:4 * H]
        c_new = f * c + i * g
        h_new = o * jnp.tanh(c_new)
        return h_new, c_new

    for layer in range(num_layers):
        wih_ref = layer_refs[3 * layer + 0]                # (Din, 4H)
        whh_ref = layer_refs[3 * layer + 1]                # (H, 4H)
        b_ref = layer_refs[3 * layer + 2]                  # (1, 4H)   f32
        layer_in = x_ref if layer == 0 else seq_ref

        # Hoisted input projection for ALL timesteps: one MXU matmul + one bias
        # broadcast per layer. (seq_ref rows may be overwritten by this layer's
        # own outputs once gx has been computed.)
        gx_ref[...] = (jnp.dot(layer_in[...], wih_ref[...],
                               preferred_element_type=jnp.float32)
                       + b_ref[...])

        # TODO(synk): for long recurrences, hold W_hh in the MXU weight regs via
        # pltpu.matmul_push_rhs / matmul_acc_lhs / matmul_pop instead of a fresh
        # jnp.dot each step.
        w_hh = whh_ref[...]                                # resident across the loop
        h0 = jnp.zeros((Bp, H), jnp.float32)               # PyTorch zero-init h0, c0
        c0 = jnp.zeros((Bp, H), jnp.float32)

        if S <= _STATIC_UNROLL_MAX_STEPS:
            # Small static S: full unroll, all row offsets are free static slices.
            h, c = h0, c0
            for t in range(S):
                r0 = t * Bp
                h, c = lstm_step(gx_ref[r0:r0 + Bp, :], h, c, w_hh)
                seq_ref[r0:r0 + Bp, :] = h.astype(seq_ref.dtype)
        else:
            # Large S: moderately unrolled fori_loop keeps scheduler visibility
            # across a few steps while bounding code size / spill pressure.
            def body(t, carry):
                h, c = carry
                r0 = pl.multiple_of(t * Bp, Bp)            # Bp is a sublane multiple
                h, c = lstm_step(gx_ref[pl.ds(r0, Bp), :], h, c, w_hh)
                seq_ref[pl.ds(r0, Bp), :] = h.astype(seq_ref.dtype)
                return (h, c)

            lax.fori_loop(0, S, body, (h0, c0), unroll=8)

    # Linear head, hoisted out of the recurrence: one full-sequence VPU multiply
    # + lane reduction and a single store (no per-step XLU reduce / vst.msk).
    y = jnp.sum(seq_ref[...].astype(jnp.float32) * wlin_ref[...],
                axis=-1, keepdims=True) + blin_ref[...]
    o_ref[...] = y


# ------------------------------ Model forward --------------------------------

def lstm_model_forward(x, params, hidden_size, num_layers,
                       compute_dtype=jnp.float32):
    """x: (B, S, input_size) batch-first, same as the PyTorch module.

    compute_dtype: dtype of the MXU operands (x, W_ih, h, W_hh) and of the
    inter-layer activation scratch. Use jnp.bfloat16 on v6e/v7x (full-rate MXU,
    half the weight/activation VMEM); keep jnp.float32 on v5e. Accumulation and
    all gate/state elementwise math stay f32 either way.
    """
    B, S, D = x.shape
    H = hidden_size
    Bp = ((B + 7) // 8) * 8                                # pad batch to a sublane tile

    x_tm = jnp.transpose(x, (1, 0, 2)).astype(compute_dtype)      # (S, B, D) time-major
    x_tm = jnp.pad(x_tm, ((0, 0), (0, Bp - B), (0, 0)))           # (S, Bp, D)
    x2d = x_tm.reshape(S * Bp, D)                                 # row = t*Bp + b

    inputs = [x2d]
    for layer in range(num_layers):
        w_ih, w_hh, b_ih, b_hh = params["lstm"][layer]
        inputs.append(jnp.transpose(w_ih).astype(compute_dtype))     # (Din, 4H)
        inputs.append(jnp.transpose(w_hh).astype(compute_dtype))     # (H, 4H)
        inputs.append((b_ih + b_hh).reshape(1, 4 * H).astype(jnp.float32))
    inputs.append(params["linear_w"].astype(jnp.float32))            # (1, H)
    inputs.append(params["linear_b"].reshape(1, 1).astype(jnp.float32))

    kernel = functools.partial(fused_lstm_kernel, seq_len=S, batch_pad=Bp,
                               hidden_size=H, num_layers=num_layers)

    scratch_shapes = [
        pltpu.VMEM((S * Bp, H), compute_dtype),        # inter-layer / head activations
        pltpu.VMEM((S * Bp, 4 * H), jnp.float32),      # hoisted input projection
    ]

    # Size the scoped-VMEM limit from the actual footprint (default is only
    # 16 MiB on v5e / 32 MiB on v6e+), with 2x headroom, capped at 128 MiB.
    footprint = sum(a.size * a.dtype.itemsize for a in inputs)
    footprint += S * Bp * H * jnp.dtype(compute_dtype).itemsize      # seq scratch
    footprint += S * Bp * 4 * H * 4                                  # gx scratch
    footprint += S * Bp * 4                                          # output
    vmem_limit = int(min(128 * 2**20, max(32 * 2**20, 2 * footprint)))

    # TODO(synk): for large B/S/H, add a "parallel" batch-tile grid axis (v7x has
    # two TensorCores), time-block x / gx / the output with a grid over S chunks
    # via BlockSpec index_maps instead of whole-sequence VMEM residency (v7x:
    # 64 MiB physical VMEM), and store gx in bf16 there as well.
    out = pl.pallas_call(
        kernel,
        out_shape=jax.ShapeDtypeStruct((S * Bp, 1), jnp.float32),
        in_specs=[pl.BlockSpec(memory_space=pltpu.MemorySpace.VMEM)] * len(inputs),
        out_specs=pl.BlockSpec(memory_space=pltpu.MemorySpace.VMEM),
        scratch_shapes=scratch_shapes,
        compiler_params=pltpu.CompilerParams(vmem_limit_bytes=vmem_limit),
    )(*inputs)

    out = out.reshape(S, Bp, 1)[:, :B, :]                  # drop padded batch rows
    return jnp.transpose(out, (1, 0, 2))                   # (B, S, 1) batch-first


# ------------------------- Pure-JAX reference (check) -------------------------

def lstm_model_ref(x, params, hidden_size, num_layers):
    H = hidden_size
    B, S, _ = x.shape
    seq = x.astype(jnp.float32)
    for layer in range(num_layers):
        w_ih, w_hh, b_ih, b_hh = params["lstm"][layer]

        def step(carry, x_t):
            hh, cc = carry
            gates = x_t @ w_ih.T + hh @ w_hh.T + b_ih + b_hh
            i = jax.nn.sigmoid(gates[:, 0 * H:1 * H])
            f = jax.nn.sigmoid(gates[:, 1 * H:2 * H])
            g = jnp.tanh(gates[:, 2 * H:3 * H])
            o = jax.nn.sigmoid(gates[:, 3 * H:4 * H])
            cc = f * cc + i * g
            hh = o * jnp.tanh(cc)
            return (hh, cc), hh

        init = (jnp.zeros((B, H), jnp.float32), jnp.zeros((B, H), jnp.float32))
        _, ys = lax.scan(step, init, jnp.transpose(seq, (1, 0, 2)))
        seq = jnp.transpose(ys, (1, 0, 2))
    return seq @ params["linear_w"].T + params["linear_b"]


# ------------------------------- Param init -----------------------------------

def init_params(key, input_size, hidden_size, num_layers):
    """Deterministic init mimicking PyTorch's U(-1/sqrt(H), 1/sqrt(H))."""
    H = hidden_size
    k = 1.0 / math.sqrt(H)
    params = {"lstm": []}
    for layer in range(num_layers):
        d_in = input_size if layer == 0 else H
        key, k1, k2, k3, k4 = jax.random.split(key, 5)
        w_ih = jax.random.uniform(k1, (4 * H, d_in), jnp.float32, -k, k)
        w_hh = jax.random.uniform(k2, (4 * H, H), jnp.float32, -k, k)
        b_ih = jax.random.uniform(k3, (4 * H,), jnp.float32, -k, k)
        b_hh = jax.random.uniform(k4, (4 * H,), jnp.float32, -k, k)
        params["lstm"].append((w_ih, w_hh, b_ih, b_hh))
    key, k5, k6 = jax.random.split(key, 3)
    params["linear_w"] = jax.random.uniform(k5, (1, H), jnp.float32, -k, k)
    params["linear_b"] = jax.random.uniform(k6, (1,), jnp.float32, -k, k)
    return params


# ----------------------------------- Main --------------------------------------

if __name__ == "__main__":
    input_size, hidden_size, num_layers = 16, 32, 2
    B, S = 2, 8

    key = jax.random.PRNGKey(0)
    key, xk, pk = jax.random.split(key, 3)
    x = jax.random.normal(xk, (B, S, input_size), jnp.float32)
    params = init_params(pk, input_size, hidden_size, num_layers)

    ref = jax.block_until_ready(lstm_model_ref(x, params, hidden_size, num_layers))

    # f32 MXU-operand path (exact check; the right choice on v5e).
    fwd = jax.jit(functools.partial(lstm_model_forward,
                                    hidden_size=hidden_size,
                                    num_layers=num_layers))
    out = jax.block_until_ready(fwd(x, params))
    assert out.shape == (B, S, 1), out.shape
    assert jnp.allclose(out, ref, rtol=1e-4, atol=1e-4), \
        float(jnp.max(jnp.abs(out - ref)))

    # bf16 MXU-operand path (v6e/v7x optimization; f32 accumulation & gate math).
    fwd_bf16 = jax.jit(functools.partial(lstm_model_forward,
                                         hidden_size=hidden_size,
                                         num_layers=num_layers,
                                         compute_dtype=jnp.bfloat16))
    out_bf16 = jax.block_until_ready(fwd_bf16(x, params))
    assert out_bf16.shape == (B, S, 1), out_bf16.shape
    assert jnp.allclose(out_bf16, ref, rtol=1e-1, atol=1e-1), \
        float(jnp.max(jnp.abs(out_bf16 - ref)))

    print("KERNEL_OK")
</pallas_src>

<mosaic_0001>
module attributes {stable_mosaic.version = 11 : i64} {
  func.func @fused_lstm_kernel(%arg0: memref<64x16xf32, #tpu.memory_space<vmem>>, %arg1: memref<16x128xf32, #tpu.memory_space<vmem>>, %arg2: memref<32x128xf32, #tpu.memory_space<vmem>>, %arg3: memref<1x128xf32, #tpu.memory_space<vmem>>, %arg4: memref<32x128xf32, #tpu.memory_space<vmem>>, %arg5: memref<32x128xf32, #tpu.memory_space<vmem>>, %arg6: memref<1x128xf32, #tpu.memory_space<vmem>>, %arg7: memref<1x32xf32, #tpu.memory_space<vmem>>, %arg8: memref<1x1xf32, #tpu.memory_space<vmem>>, %arg9: memref<64x1xf32, #tpu.memory_space<vmem>>, %arg10: memref<64x32xf32, #tpu.memory_space<vmem>>, %arg11: memref<64x128xf32, #tpu.memory_space<vmem>>) attributes {dimension_semantics = [], scalar_prefetch = 0 : i64, scratch_operands = 2 : i64, tpu.core_type = #tpu.core_type<tc>} {
    %c0 = arith.constant 0 : index
    %c0_0 = arith.constant 0 : index
    %0 = vector.load %arg0[%c0, %c0_0] : memref<64x16xf32, #tpu.memory_space<vmem>>, vector<64x16xf32>
    %c0_1 = arith.constant 0 : index
    %c0_2 = arith.constant 0 : index
    %1 = vector.load %arg1[%c0_1, %c0_2] : memref<16x128xf32, #tpu.memory_space<vmem>>, vector<16x128xf32>
    %cst = arith.constant dense<0.000000e+00> : vector<64x128xf32>
    %2 = tpu.matmul %0, %1, %cst {dimension_numbers = #tpu.dot_dimension_numbers<[1], [0], [0], [1], [0, 0, 1, 1], [], []>} : vector<64x16xf32>, vector<16x128xf32>, vector<64x128xf32> -> vector<64x128xf32>
    %c0_3 = arith.constant 0 : index
    %c0_4 = arith.constant 0 : index
    %3 = vector.load %arg3[%c0_3, %c0_4] : memref<1x128xf32, #tpu.memory_space<vmem>>, vector<1x128xf32>
    %4 = vector.broadcast %3 : vector<1x128xf32> to vector<64x128xf32>
    %5 = arith.addf %2, %4 : vector<64x128xf32>
    %c0_5 = arith.constant 0 : index
    %c0_6 = arith.constant 0 : index
    %6 = vector.load %arg11[%c0_5, %c0_6] : memref<64x128xf32, #tpu.memory_space<vmem>>, vector<64x128xf32>
    tpu.vector_store %arg11[%c0_5, %c0_6], %5 {strides = array<i32>} : memref<64x128xf32, #tpu.memory_space<vmem>>, vector<64x128xf32>,
    %c0_7 = arith.constant 0 : index
    %c0_8 = arith.constant 0 : index
    %7 = vector.load %arg2[%c0_7, %c0_8] : memref<32x128xf32, #tpu.memory_space<vmem>>, vector<32x128xf32>
    %cst_9 = arith.constant 0.000000e+00 : f32
    %8 = vector.broadcast %cst_9 : f32 to vector<8x32xf32>
    %cst_10 = arith.constant 0.000000e+00 : f32
    %9 = vector.broadcast %cst_10 : f32 to vector<8x32xf32>
    %c0_11 = arith.constant 0 : index
    %c0_12 = arith.constant 0 : index
    %10 = vector.load %arg11[%c0_11, %c0_12] : memref<64x128xf32, #tpu.memory_space<vmem>>, vector<8x128xf32>
    %cst_13 = arith.constant dense<0.000000e+00> : vector<8x128xf32>
    %11 = tpu.matmul %8, %7, %cst_13 {dimension_numbers = #tpu.dot_dimension_numbers<[1], [0], [0], [1], [0, 0, 1, 1], [], []>} : vector<8x32xf32>, vector<32x128xf32>, vector<8x128xf32> -> vector<8x128xf32>
    %12 = arith.addf %10, %11 : vector<8x128xf32>
    %13 = arith.negf %12 : vector<8x128xf32>
    %14 = math.exp %13 : vector<8x128xf32>
    %cst_14 = arith.constant 1.000000e+00 : f32
    %15 = vector.broadcast %cst_14 : f32 to vector<8x128xf32>
    %16 = arith.addf %15, %14 : vector<8x128xf32>
    %17 = arith.divf %15, %16 : vector<8x128xf32>
    %18 = math.tanh %12 : vector<8x128xf32>
    %19 = vector.extract_strided_slice %17 {offsets = [0, 0], sizes = [8, 32], strides = [1, 1]} : vector<8x128xf32> to vector<8x32xf32>
    %20 = vector.extract_strided_slice %17 {offsets = [0, 32], sizes = [8, 32], strides = [1, 1]} : vector<8x128xf32> to vector<8x32xf32>
    %21 = vector.extract_strided_slice %18 {offsets = [0, 64], sizes = [8, 32], strides = [1, 1]} : vector<8x128xf32> to vector<8x32xf32>
    %22 = vector.extract_strided_slice %17 {offsets = [0, 96], sizes = [8, 32], strides = [1, 1]} : vector<8x128xf32> to vector<8x32xf32>
    %23 = arith.mulf %20, %9 : vector<8x32xf32>
    %24 = arith.mulf %19, %21 : vector<8x32xf32>
    %25 = arith.addf %23, %24 : vector<8x32xf32>
    %26 = math.tanh %25 : vector<8x32xf32>
    %27 = arith.mulf %22, %26 : vector<8x32xf32>
    %c0_15 = arith.constant 0 : index
    %c0_16 = arith.constant 0 : index
    %28 = vector.load %arg10[%c0_15, %c0_16] : memref<64x32xf32, #tpu.memory_space<vmem>>, vector<8x32xf32>
    tpu.vector_store %arg10[%c0_15, %c0_16], %27 {strides = array<i32>} : memref<64x32xf32, #tpu.memory_space<vmem>>, vector<8x32xf32>,
    %c8 = arith.constant 8 : index
    %c0_17 = arith.constant 0 : index
    %29 = vector.load %arg11[%c8, %c0_17] : memref<64x128xf32, #tpu.memory_space<vmem>>, vector<8x128xf32>
    %cst_18 = arith.constant dense<0.000000e+00> : vector<8x128xf32>
    %30 = tpu.matmul %27, %7, %cst_18 {dimension_numbers = #tpu.dot_dimension_numbers<[1], [0], [0], [1], [0, 0, 1, 1], [], []>} : vector<8x32xf32>, vector<32x128xf32>, vector<8x128xf32> -> vector<8x128xf32>
    %31 = arith.addf %29, %30 : vector<8x128xf32>
    %32 = arith.negf %31 : vector<8x128xf32>
    %33 = math.exp %32 : vector<8x128xf32>
    %cst_19 = arith.constant 1.000000e+00 : f32
    %34 = vector.broadcast %cst_19 : f32 to vector<8x128xf32>
    %35 = arith.addf %34, %33 : vector<8x128xf32>
    %36 = arith.divf %34, %35 : vector<8x128xf32>
    %37 = math.tanh %31 : vector<8x128xf32>
    %38 = vector.extract_strided_slice %36 {offsets = [0, 0], sizes = [8, 32], strides = [1, 1]} : vector<8x128xf32> to vector<8x32xf32>
    %39 = vector.extract_strided_slice %36 {offsets = [0, 32], sizes = [8, 32], strides = [1, 1]} : vector<8x128xf32> to vector<8x32xf32>
    %40 = vector.extract_strided_slice %37 {offsets = [0, 64], sizes = [8, 32], strides = [1, 1]} : vector<8x128xf32> to vector<8x32xf32>
    %41 = vector.extract_strided_slice %36 {offsets = [0, 96], sizes = [8, 32], strides = [1, 1]} : vector<8x128xf32> to vector<8x32xf32>
    %42 = arith.mulf %39, %25 : vector<8x32xf32>
    %43 = arith.mulf %38, %40 : vector<8x32xf32>
    %44 = arith.addf %42, %43 : vector<8x32xf32>
    %45 = math.tanh %44 : vector<8x32xf32>
    %46 = arith.mulf %41, %45 : vector<8x32xf32>
    %c8_20 = arith.constant 8 : index
    %c0_21 = arith.constant 0 : index
    %47 = vector.load %arg10[%c8_20, %c0_21] : memref<64x32xf32, #tpu.memory_space<vmem>>, vector<8x32xf32>
    tpu.vector_store %arg10[%c8_20, %c0_21], %46 {strides = array<i32>} : memref<64x32xf32, #tpu.memory_space<vmem>>, vector<8x32xf32>,
    %c16 = arith.constant 16 : index
    %c0_22 = arith.constant 0 : index
    %48 = vector.load %arg11[%c16, %c0_22] : memref<64x128xf32, #tpu.memory_space<vmem>>, vector<8x128xf32>
    %cst_23 = arith.constant dense<0.000000e+00> : vector<8x128xf32>
    %49 = tpu.matmul %46, %7, %cst_23 {dimension_numbers = #tpu.dot_dimension_numbers<[1], [0], [0], [1], [0, 0, 1, 1], [], []>} : vector<8x32xf32>, vector<32x128xf32>, vector<8x128xf32> -> vector<8x128xf32>
    %50 = arith.addf %48, %49 : vector<8x128xf32>
    %51 = arith.negf %50 : vector<8x128xf32>
    %52 = math.exp %51 : vector<8x128xf32>
    %cst_24 = arith.constant 1.000000e+00 : f32
    %53 = vector.broadcast %cst_24 : f32 to vector<8x128xf32>
    %54 = arith.addf %53, %52 : vector<8x128xf32>
    %55 = arith.divf %53, %54 : vector<8x128xf32>
    %56 = math.tanh %50 : vector<8x128xf32>
    %57 = vector.extract_strided_slice %55 {offsets = [0, 0], sizes = [8, 32], strides = [1, 1]} : vector<8x128xf32> to vector<8x32xf32>
    %58 = vector.extract_strided_slice %55 {offsets = [0, 32], sizes = [8, 32], strides = [1, 1]} : vector<8x128xf32> to vector<8x32xf32>
    %59 = vector.extract_strided_slice %56 {offsets = [0, 64], sizes = [8, 32], strides = [1, 1]} : vector<8x128xf32> to vector<8x32xf32>
    %60 = vector.extract_strided_slice %55 {offsets = [0, 96], sizes = [8, 32], strides = [1, 1]} : vector<8x128xf32> to vector<8x32xf32>
    %61 = arith.mulf %58, %44 : vector<8x32xf32>
    %62 = arith.mulf %57, %59 : vector<8x32xf32>
    %63 = arith.addf %61, %62 : vector<8x32xf32>
    %64 = math.tanh %63 : vector<8x32xf32>
    %65 = arith.mulf %60, %64 : vector<8x32xf32>
    %c16_25 = arith.constant 16 : index
    %c0_26 = arith.constant 0 : index
    %66 = vector.load %arg10[%c16_25, %c0_26] : memref<64x32xf32, #tpu.memory_space<vmem>>, vector<8x32xf32>
    tpu.vector_store %arg10[%c16_25, %c0_26], %65 {strides = array<i32>} : memref<64x32xf32, #tpu.memory_space<vmem>>, vector<8x32xf32>,
    %c24 = arith.constant 24 : index
    %c0_27 = arith.constant 0 : index
    %67 = vector.load %arg11[%c24, %c0_27] : memref<64x128xf32, #tpu.memory_space<vmem>>, vector<8x128xf32>
    %cst_28 = arith.constant dense<0.000000e+00> : vector<8x128xf32>
    %68 = tpu.matmul %65, %7, %cst_28 {dimension_numbers = #tpu.dot_dimension_numbers<[1], [0], [0], [1], [0, 0, 1, 1], [], []>} : vector<8x32xf32>, vector<32x128xf32>, vector<8x128xf32> -> vector<8x128xf32>
    %69 = arith.addf %67, %68 : vector<8x128xf32>
    %70 = arith.negf %69 : vector<8x128xf32>
    %71 = math.exp %70 : vector<8x128xf32>
    %cst_29 = arith.constant 1.000000e+00 : f32
    %72 = vector.broadcast %cst_29 : f32 to vector<8x128xf32>
    %73 = arith.addf %72, %71 : vector<8x128xf32>
    %74 = arith.divf %72, %73 : vector<8x128xf32>
    %75 = math.tanh %69 : vector<8x128xf32>
    %76 = vector.extract_strided_slice %74 {offsets = [0, 0], sizes = [8, 32], strides = [1, 1]} : vector<8x128xf32> to vector<8x32xf32>
    %77 = vector.extract_strided_slice %74 {offsets = [0, 32], sizes = [8, 32], strides = [1, 1]} : vector<8x128xf32> to vector<8x32xf32>
    %78 = vector.extract_strided_slice %75 {offsets = [0, 64], sizes = [8, 32], strides = [1, 1]} : vector<8x128xf32> to vector<8x32xf32>
    %79 = vector.extract_strided_slice %74 {offsets = [0, 96], sizes = [8, 32], strides = [1, 1]} : vector<8x128xf32> to vector<8x32xf32>
    %80 = arith.mulf %77, %63 : vector<8x32xf32>
    %81 = arith.mulf %76, %78 : vector<8x32xf32>
    %82 = arith.addf %80, %81 : vector<8x32xf32>
    %83 = math.tanh %82 : vector<8x32xf32>
    %84 = arith.mulf %79, %83 : vector<8x32xf32>
    %c24_30 = arith.constant 24 : index
    %c0_31 = arith.constant 0 : index
    %85 = vector.load %arg10[%c24_30, %c0_31] : memref<64x32xf32, #tpu.memory_space<vmem>>, vector<8x32xf32>
    tpu.vector_store %arg10[%c24_30, %c0_31], %84 {strides = array<i32>} : memref<64x32xf32, #tpu.memory_space<vmem>>, vector<8x32xf32>,
    %c32 = arith.constant 32 : index
    %c0_32 = arith.constant 0 : index
    %86 = vector.load %arg11[%c32, %c0_32] : memref<64x128xf32, #tpu.memory_space<vmem>>, vector<8x128xf32>
    %cst_33 = arith.constant dense<0.000000e+00> : vector<8x128xf32>
    %87 = tpu.matmul %84, %7, %cst_33 {dimension_numbers = #tpu.dot_dimension_numbers<[1], [0], [0], [1], [0, 0, 1, 1], [], []>} : vector<8x32xf32>, vector<32x128xf32>, vector<8x128xf32> -> vector<8x128xf32>
    %88 = arith.addf %86, %87 : vector<8x128xf32>
    %89 = arith.negf %88 : vector<8x128xf32>
    %90 = math.exp %89 : vector<8x128xf32>
    %cst_34 = arith.constant 1.000000e+00 : f32
    %91 = vector.broadcast %cst_34 : f32 to vector<8x128xf32>
    %92 = arith.addf %91, %90 : vector<8x128xf32>
    %93 = arith.divf %91, %92 : vector<8x128xf32>
    %94 = math.tanh %88 : vector<8x128xf32>
    %95 = vector.extract_strided_slice %93 {offsets = [0, 0], sizes = [8, 32], strides = [1, 1]} : vector<8x128xf32> to vector<8x32xf32>
    %96 = vector.extract_strided_slice %93 {offsets = [0, 32], sizes = [8, 32], strides = [1, 1]} : vector<8x128xf32> to vector<8x32xf32>
    %97 = vector.extract_strided_slice %94 {offsets = [0, 64], sizes = [8, 32], strides = [1, 1]} : vector<8x128xf32> to vector<8x32xf32>
    %98 = vector.extract_strided_slice %93 {offsets = [0, 96], sizes = [8, 32], strides = [1, 1]} : vector<8x128xf32> to vector<8x32xf32>
    %99 = arith.mulf %96, %82 : vector<8x32xf32>
    %100 = arith.mulf %95, %97 : vector<8x32xf32>
    %101 = arith.addf %99, %100 : vector<8x32xf32>
    %102 = math.tanh %101 : vector<8x32xf32>
    %103 = arith.mulf %98, %102 : vector<8x32xf32>
    %c32_35 = arith.constant 32 : index
    %c0_36 = arith.constant 0 : index
    %104 = vector.load %arg10[%c32_35, %c0_36] : memref<64x32xf32, #tpu.memory_space<vmem>>, vector<8x32xf32>
    tpu.vector_store %arg10[%c32_35, %c0_36], %103 {strides = array<i32>} : memref<64x32xf32, #tpu.memory_space<vmem>>, vector<8x32xf32>,
    %c40 = arith.constant 40 : index
    %c0_37 = arith.constant 0 : index
    %105 = vector.load %arg11[%c40, %c0_37] : memref<64x128xf32, #tpu.memory_space<vmem>>, vector<8x128xf32>
    %cst_38 = arith.constant dense<0.000000e+00> : vector<8x128xf32>
    %106 = tpu.matmul %103, %7, %cst_38 {dimension_numbers = #tpu.dot_dimension_numbers<[1], [0], [0], [1], [0, 0, 1, 1], [], []>} : vector<8x32xf32>, vector<32x128xf32>, vector<8x128xf32> -> vector<8x128xf32>
    %107 = arith.addf %105, %106 : vector<8x128xf32>
    %108 = arith.negf %107 : vector<8x128xf32>
    %109 = math.exp %108 : vector<8x128xf32>
    %cst_39 = arith.constant 1.000000e+00 : f32
    %110 = vector.broadcast %cst_39 : f32 to vector<8x128xf32>
    %111 = arith.addf %110, %109 : vector<8x128xf32>
    %112 = arith.divf %110, %111 : vector<8x128xf32>
    %113 = math.tanh %107 : vector<8x128xf32>
    %114 = vector.extract_strided_slice %112 {offsets = [0, 0], sizes = [8, 32], strides = [1, 1]} : vector<8x128xf32> to vector<8x32xf32>
    %115 = vector.extract_strided_slice %112 {offsets = [0, 32], sizes = [8, 32], strides = [1, 1]} : vector<8x128xf32> to vector<8x32xf32>
    %116 = vector.extract_strided_slice %113 {offsets = [0, 64], sizes = [8, 32], strides = [1, 1]} : vector<8x128xf32> to vector<8x32xf32>
    %117 = vector.extract_strided_slice %112 {offsets = [0, 96], sizes = [8, 32], strides = [1, 1]} : vector<8x128xf32> to vector<8x32xf32>
    %118 = arith.mulf %115, %101 : vector<8x32xf32>
    %119 = arith.mulf %114, %116 : vector<8x32xf32>
    %120 = arith.addf %118, %119 : vector<8x32xf32>
    %121 = math.tanh %120 : vector<8x32xf32>
    %122 = arith.mulf %117, %121 : vector<8x32xf32>
    %c40_40 = arith.constant 40 : index
    %c0_41 = arith.constant 0 : index
    %123 = vector.load %arg10[%c40_40, %c0_41] : memref<64x32xf32, #tpu.memory_space<vmem>>, vector<8x32xf32>
    tpu.vector_store %arg10[%c40_40, %c0_41], %122 {strides = array<i32>} : memref<64x32xf32, #tpu.memory_space<vmem>>, vector<8x32xf32>,
    %c48 = arith.constant 48 : index
    %c0_42 = arith.constant 0 : index
    %124 = vector.load %arg11[%c48, %c0_42] : memref<64x128xf32, #tpu.memory_space<vmem>>, vector<8x128xf32>
    %cst_43 = arith.constant dense<0.000000e+00> : vector<8x128xf32>
    %125 = tpu.matmul %122, %7, %cst_43 {dimension_numbers = #tpu.dot_dimension_numbers<[1], [0], [0], [1], [0, 0, 1, 1], [], []>} : vector<8x32xf32>, vector<32x128xf32>, vector<8x128xf32> -> vector<8x128xf32>
    %126 = arith.addf %124, %125 : vector<8x128xf32>
    %127 = arith.negf %126 : vector<8x128xf32>
    %128 = math.exp %127 : vector<8x128xf32>
    %cst_44 = arith.constant 1.000000e+00 : f32
    %129 = vector.broadcast %cst_44 : f32 to vector<8x128xf32>
    %130 = arith.addf %129, %128 : vector<8x128xf32>
    %131 = arith.divf %129, %130 : vector<8x128xf32>
    %132 = math.tanh %126 : vector<8x128xf32>
    %133 = vector.extract_strided_slice %131 {offsets = [0, 0], sizes = [8, 32], strides = [1, 1]} : vector<8x128xf32> to vector<8x32xf32>
    %134 = vector.extract_strided_slice %131 {offsets = [0, 32], sizes = [8, 32], strides = [1, 1]} : vector<8x128xf32> to vector<8x32xf32>
    %135 = vector.extract_strided_slice %132 {offsets = [0, 64], sizes = [8, 32], strides = [1, 1]} : vector<8x128xf32> to vector<8x32xf32>
    %136 = vector.extract_strided_slice %131 {offsets = [0, 96], sizes = [8, 32], strides = [1, 1]} : vector<8x128xf32> to vector<8x32xf32>
    %137 = arith.mulf %134, %120 : vector<8x32xf32>
    %138 = arith.mulf %133, %135 : vector<8x32xf32>
    %139 = arith.addf %137, %138 : vector<8x32xf32>
    %140 = math.tanh %139 : vector<8x32xf32>
    %141 = arith.mulf %136, %140 : vector<8x32xf32>
    %c48_45 = arith.constant 48 : index
    %c0_46 = arith.constant 0 : index
    %142 = vector.load %arg10[%c48_45, %c0_46] : memref<64x32xf32, #tpu.memory_space<vmem>>, vector<8x32xf32>
    tpu.vector_store %arg10[%c48_45, %c0_46], %141 {strides = array<i32>} : memref<64x32xf32, #tpu.memory_space<vmem>>, vector<8x32xf32>,
    %c56 = arith.constant 56 : index
    %c0_47 = arith.constant 0 : index
    %143 = vector.load %arg11[%c56, %c0_47] : memref<64x128xf32, #tpu.memory_space<vmem>>, vector<8x128xf32>
    %cst_48 = arith.constant dense<0.000000e+00> : vector<8x128xf32>
    %144 = tpu.matmul %141, %7, %cst_48 {dimension_numbers = #tpu.dot_dimension_numbers<[1], [0], [0], [1], [0, 0, 1, 1], [], []>} : vector<8x32xf32>, vector<32x128xf32>, vector<8x128xf32> -> vector<8x128xf32>
    %145 = arith.addf %143, %144 : vector<8x128xf32>
    %146 = arith.negf %145 : vector<8x128xf32>
    %147 = math.exp %146 : vector<8x128xf32>
    %cst_49 = arith.constant 1.000000e+00 : f32
    %148 = vector.broadcast %cst_49 : f32 to vector<8x128xf32>
    %149 = arith.addf %148, %147 : vector<8x128xf32>
    %150 = arith.divf %148, %149 : vector<8x128xf32>
    %151 = math.tanh %145 : vector<8x128xf32>
    %152 = vector.extract_strided_slice %150 {offsets = [0, 0], sizes = [8, 32], strides = [1, 1]} : vector<8x128xf32> to vector<8x32xf32>
    %153 = vector.extract_strided_slice %150 {offsets = [0, 32], sizes = [8, 32], strides = [1, 1]} : vector<8x128xf32> to vector<8x32xf32>
    %154 = vector.extract_strided_slice %151 {offsets = [0, 64], sizes = [8, 32], strides = [1, 1]} : vector<8x128xf32> to vector<8x32xf32>
    %155 = vector.extract_strided_slice %150 {offsets = [0, 96], sizes = [8, 32], strides = [1, 1]} : vector<8x128xf32> to vector<8x32xf32>
    %156 = arith.mulf %153, %139 : vector<8x32xf32>
    %157 = arith.mulf %152, %154 : vector<8x32xf32>
    %158 = arith.addf %156, %157 : vector<8x32xf32>
    %159 = math.tanh %158 : vector<8x32xf32>
    %160 = arith.mulf %155, %159 : vector<8x32xf32>
    %c56_50 = arith.constant 56 : index
    %c0_51 = arith.constant 0 : index
    %161 = vector.load %arg10[%c56_50, %c0_51] : memref<64x32xf32, #tpu.memory_space<vmem>>, vector<8x32xf32>
    tpu.vector_store %arg10[%c56_50, %c0_51], %160 {strides = array<i32>} : memref<64x32xf32, #tpu.memory_space<vmem>>, vector<8x32xf32>,
    %c0_52 = arith.constant 0 : index
    %c0_53 = arith.constant 0 : index
    %162 = vector.load %arg10[%c0_52, %c0_53] : memref<64x32xf32, #tpu.memory_space<vmem>>, vector<64x32xf32>
    %c0_54 = arith.constant 0 : index
    %c0_55 = arith.constant 0 : index
    %163 = vector.load %arg4[%c0_54, %c0_55] : memref<32x128xf32, #tpu.memory_space<vmem>>, vector<32x128xf32>
    %cst_56 = arith.constant dense<0.000000e+00> : vector<64x128xf32>
    %164 = tpu.matmul %162, %163, %cst_56 {dimension_numbers = #tpu.dot_dimension_numbers<[1], [0], [0], [1], [0, 0, 1, 1], [], []>} : vector<64x32xf32>, vector<32x128xf32>, vector<64x128xf32> -> vector<64x128xf32>
    %c0_57 = arith.constant 0 : index
    %c0_58 = arith.constant 0 : index
    %165 = vector.load %arg6[%c0_57, %c0_58] : memref<1x128xf32, #tpu.memory_space<vmem>>, vector<1x128xf32>
    %166 = vector.broadcast %165 : vector<1x128xf32> to vector<64x128xf32>
    %167 = arith.addf %164, %166 : vector<64x128xf32>
    %c0_59 = arith.constant 0 : index
    %c0_60 = arith.constant 0 : index
    %168 = vector.load %arg11[%c0_59, %c0_60] : memref<64x128xf32, #tpu.memory_space<vmem>>, vector<64x128xf32>
    tpu.vector_store %arg11[%c0_59, %c0_60], %167 {strides = array<i32>} : memref<64x128xf32, #tpu.memory_space<vmem>>, vector<64x128xf32>,
    %c0_61 = arith.constant 0 : index
    %c0_62 = arith.constant 0 : index
    %169 = vector.load %arg5[%c0_61, %c0_62] : memref<32x128xf32, #tpu.memory_space<vmem>>, vector<32x128xf32>
    %cst_63 = arith.constant 0.000000e+00 : f32
    %170 = vector.broadcast %cst_63 : f32 to vector<8x32xf32>
    %cst_64 = arith.constant 0.000000e+00 : f32
    %171 = vector.broadcast %cst_64 : f32 to vector<8x32xf32>
    %c0_65 = arith.constant 0 : index
    %c0_66 = arith.constant 0 : index
    %172 = vector.load %arg11[%c0_65, %c0_66] : memref<64x128xf32, #tpu.memory_space<vmem>>, vector<8x128xf32>
    %cst_67 = arith.constant dense<0.000000e+00> : vector<8x128xf32>
    %173 = tpu.matmul %170, %169, %cst_67 {dimension_numbers = #tpu.dot_dimension_numbers<[1], [0], [0], [1], [0, 0, 1, 1], [], []>} : vector<8x32xf32>, vector<32x128xf32>, vector<8x128xf32> -> vector<8x128xf32>
    %174 = arith.addf %172, %173 : vector<8x128xf32>
    %175 = arith.negf %174 : vector<8x128xf32>
    %176 = math.exp %175 : vector<8x128xf32>
    %cst_68 = arith.constant 1.000000e+00 : f32
    %177 = vector.broadcast %cst_68 : f32 to vector<8x128xf32>
    %178 = arith.addf %177, %176 : vector<8x128xf32>
    %179 = arith.divf %177, %178 : vector<8x128xf32>
    %180 = math.tanh %174 : vector<8x128xf32>
    %181 = vector.extract_strided_slice %179 {offsets = [0, 0], sizes = [8, 32], strides = [1, 1]} : vector<8x128xf32> to vector<8x32xf32>
    %182 = vector.extract_strided_slice %179 {offsets = [0, 32], sizes = [8, 32], strides = [1, 1]} : vector<8x128xf32> to vector<8x32xf32>
    %183 = vector.extract_strided_slice %180 {offsets = [0, 64], sizes = [8, 32], strides = [1, 1]} : vector<8x128xf32> to vector<8x32xf32>
    %184 = vector.extract_strided_slice %179 {offsets = [0, 96], sizes = [8, 32], strides = [1, 1]} : vector<8x128xf32> to vector<8x32xf32>
    %185 = arith.mulf %182, %171 : vector<8x32xf32>
    %186 = arith.mulf %181, %183 : vector<8x32xf32>
    %187 = arith.addf %185, %186 : vector<8x32xf32>
    %188 = math.tanh %187 : vector<8x32xf32>
    %189 = arith.mulf %184, %188 : vector<8x32xf32>
    %c0_69 = arith.constant 0 : index
    %c0_70 = arith.constant 0 : index
    %190 = vector.load %arg10[%c0_69, %c0_70] : memref<64x32xf32, #tpu.memory_space<vmem>>, vector<8x32xf32>
    tpu.vector_store %arg10[%c0_69, %c0_70], %189 {strides = array<i32>} : memref<64x32xf32, #tpu.memory_space<vmem>>, vector<8x32xf32>,
    %c8_71 = arith.constant 8 : index
    %c0_72 = arith.constant 0 : index
    %191 = vector.load %arg11[%c8_71, %c0_72] : memref<64x128xf32, #tpu.memory_space<vmem>>, vector<8x128xf32>
    %cst_73 = arith.constant dense<0.000000e+00> : vector<8x128xf32>
    %192 = tpu.matmul %189, %169, %cst_73 {dimension_numbers = #tpu.dot_dimension_numbers<[1], [0], [0], [1], [0, 0, 1, 1], [], []>} : vector<8x32xf32>, vector<32x128xf32>, vector<8x128xf32> -> vector<8x128xf32>
    %193 = arith.addf %191, %192 : vector<8x128xf32>
    %194 = arith.negf %193 : vector<8x128xf32>
    %195 = math.exp %194 : vector<8x128xf32>
    %cst_74 = arith.constant 1.000000e+00 : f32
    %196 = vector.broadcast %cst_74 : f32 to vector<8x128xf32>
    %197 = arith.addf %196, %195 : vector<8x128xf32>
    %198 = arith.divf %196, %197 : vector<8x128xf32>
    %199 = math.tanh %193 : vector<8x128xf32>
    %200 = vector.extract_strided_slice %198 {offsets = [0, 0], sizes = [8, 32], strides = [1, 1]} : vector<8x128xf32> to vector<8x32xf32>
    %201 = vector.extract_strided_slice %198 {offsets = [0, 32], sizes = [8, 32], strides = [1, 1]} : vector<8x128xf32> to vector<8x32xf32>
    %202 = vector.extract_strided_slice %199 {offsets = [0, 64], sizes = [8, 32], strides = [1, 1]} : vector<8x128xf32> to vector<8x32xf32>
    %203 = vector.extract_strided_slice %198 {offsets = [0, 96], sizes = [8, 32], strides = [1, 1]} : vector<8x128xf32> to vector<8x32xf32>
    %204 = arith.mulf %201, %187 : vector<8x32xf32>
    %205 = arith.mulf %200, %202 : vector<8x32xf32>
    %206 = arith.addf %204, %205 : vector<8x32xf32>
    %207 = math.tanh %206 : vector<8x32xf32>
    %208 = arith.mulf %203, %207 : vector<8x32xf32>
    %c8_75 = arith.constant 8 : index
    %c0_76 = arith.constant 0 : index
    %209 = vector.load %arg10[%c8_75, %c0_76] : memref<64x32xf32, #tpu.memory_space<vmem>>, vector<8x32xf32>
    tpu.vector_store %arg10[%c8_75, %c0_76], %208 {strides = array<i32>} : memref<64x32xf32, #tpu.memory_space<vmem>>, vector<8x32xf32>,
    %c16_77 = arith.constant 16 : index
    %c0_78 = arith.constant 0 : index
    %210 = vector.load %arg11[%c16_77, %c0_78] : memref<64x128xf32, #tpu.memory_space<vmem>>, vector<8x128xf32>
    %cst_79 = arith.constant dense<0.000000e+00> : vector<8x128xf32>
    %211 = tpu.matmul %208, %169, %cst_79 {dimension_numbers = #tpu.dot_dimension_numbers<[1], [0], [0], [1], [0, 0, 1, 1], [], []>} : vector<8x32xf32>, vector<32x128xf32>, vector<8x128xf32> -> vector<8x128xf32>
    %212 = arith.addf %210, %211 : vector<8x128xf32>
    %213 = arith.negf %212 : vector<8x128xf32>
    %214 = math.exp %213 : vector<8x128xf32>
    %cst_80 = arith.constant 1.000000e+00 : f32
    %215 = vector.broadcast %cst_80 : f32 to vector<8x128xf32>
    %216 = arith.addf %215, %214 : vector<8x128xf32>
    %217 = arith.divf %215, %216 : vector<8x128xf32>
    %218 = math.tanh %212 : vector<8x128xf32>
    %219 = vector.extract_strided_slice %217 {offsets = [0, 0], sizes = [8, 32], strides = [1, 1]} : vector<8x128xf32> to vector<8x32xf32>
    %220 = vector.extract_strided_slice %217 {offsets = [0, 32], sizes = [8, 32], strides = [1, 1]} : vector<8x128xf32> to vector<8x32xf32>
    %221 = vector.extract_strided_slice %218 {offsets = [0, 64], sizes = [8, 32], strides = [1, 1]} : vector<8x128xf32> to vector<8x32xf32>
    %222 = vector.extract_strided_slice %217 {offsets = [0, 96], sizes = [8, 32], strides = [1, 1]} : vector<8x128xf32> to vector<8x32xf32>
    %223 = arith.mulf %220, %206 : vector<8x32xf32>
    %224 = arith.mulf %219, %221 : vector<8x32xf32>
    %225 = arith.addf %223, %224 : vector<8x32xf32>
    %226 = math.tanh %225 : vector<8x32xf32>
    %227 = arith.mulf %222, %226 : vector<8x32xf32>
    %c16_81 = arith.constant 16 : index
    %c0_82 = arith.constant 0 : index
    %228 = vector.load %arg10[%c16_81, %c0_82] : memref<64x32xf32, #tpu.memory_space<vmem>>, vector<8x32xf32>
    tpu.vector_store %arg10[%c16_81, %c0_82], %227 {strides = array<i32>} : memref<64x32xf32, #tpu.memory_space<vmem>>, vector<8x32xf32>,
    %c24_83 = arith.constant 24 : index
    %c0_84 = arith.constant 0 : index
    %229 = vector.load %arg11[%c24_83, %c0_84] : memref<64x128xf32, #tpu.memory_space<vmem>>, vector<8x128xf32>
    %cst_85 = arith.constant dense<0.000000e+00> : vector<8x128xf32>
    %230 = tpu.matmul %227, %169, %cst_85 {dimension_numbers = #tpu.dot_dimension_numbers<[1], [0], [0], [1], [0, 0, 1, 1], [], []>} : vector<8x32xf32>, vector<32x128xf32>, vector<8x128xf32> -> vector<8x128xf32>
    %231 = arith.addf %229, %230 : vector<8x128xf32>
    %232 = arith.negf %231 : vector<8x128xf32>
    %233 = math.exp %232 : vector<8x128xf32>
    %cst_86 = arith.constant 1.000000e+00 : f32
    %234 = vector.broadcast %cst_86 : f32 to vector<8x128xf32>
    %235 = arith.addf %234, %233 : vector<8x128xf32>
    %236 = arith.divf %234, %235 : vector<8x128xf32>
    %237 = math.tanh %231 : vector<8x128xf32>
    %238 = vector.extract_strided_slice %236 {offsets = [0, 0], sizes = [8, 32], strides = [1, 1]} : vector<8x128xf32> to vector<8x32xf32>
    %239 = vector.extract_strided_slice %236 {offsets = [0, 32], sizes = [8, 32], strides = [1, 1]} : vector<8x128xf32> to vector<8x32xf32>
    %240 = vector.extract_strided_slice %237 {offsets = [0, 64], sizes = [8, 32], strides = [1, 1]} : vector<8x128xf32> to vector<8x32xf32>
    %241 = vector.extract_strided_slice %236 {offsets = [0, 96], sizes = [8, 32], strides = [1, 1]} : vector<8x128xf32> to vector<8x32xf32>
    %242 = arith.mulf %239, %225 : vector<8x32xf32>
    %243 = arith.mulf %238, %240 : vector<8x32xf32>
    %244 = arith.addf %242, %243 : vector<8x32xf32>
    %245 = math.tanh %244 : vector<8x32xf32>
    %246 = arith.mulf %241, %245 : vector<8x32xf32>
    %c24_87 = arith.constant 24 : index
    %c0_88 = arith.constant 0 : index
    %247 = vector.load %arg10[%c24_87, %c0_88] : memref<64x32xf32, #tpu.memory_space<vmem>>, vector<8x32xf32>
    tpu.vector_store %arg10[%c24_87, %c0_88], %246 {strides = array<i32>} : memref<64x32xf32, #tpu.memory_space<vmem>>, vector<8x32xf32>,
    %c32_89 = arith.constant 32 : index
    %c0_90 = arith.constant 0 : index
    %248 = vector.load %arg11[%c32_89, %c0_90] : memref<64x128xf32, #tpu.memory_space<vmem>>, vector<8x128xf32>
    %cst_91 = arith.constant dense<0.000000e+00> : vector<8x128xf32>
    %249 = tpu.matmul %246, %169, %cst_91 {dimension_numbers = #tpu.dot_dimension_numbers<[1], [0], [0], [1], [0, 0, 1, 1], [], []>} : vector<8x32xf32>, vector<32x128xf32>, vector<8x128xf32> -> vector<8x128xf32>
    %250 = arith.addf %248, %249 : vector<8x128xf32>
    %251 = arith.negf %250 : vector<8x128xf32>
    %252 = math.exp %251 : vector<8x128xf32>
    %cst_92 = arith.constant 1.000000e+00 : f32
    %253 = vector.broadcast %cst_92 : f32 to vector<8x128xf32>
    %254 = arith.addf %253, %252 : vector<8x128xf32>
    %255 = arith.divf %253, %254 : vector<8x128xf32>
    %256 = math.tanh %250 : vector<8x128xf32>
    %257 = vector.extract_strided_slice %255 {offsets = [0, 0], sizes = [8, 32], strides = [1, 1]} : vector<8x128xf32> to vector<8x32xf32>
    %258 = vector.extract_strided_slice %255 {offsets = [0, 32], sizes = [8, 32], strides = [1, 1]} : vector<8x128xf32> to vector<8x32xf32>
    %259 = vector.extract_strided_slice %256 {offsets = [0, 64], sizes = [8, 32], strides = [1, 1]} : vector<8x128xf32> to vector<8x32xf32>
    %260 = vector.extract_strided_slice %255 {offsets = [0, 96], sizes = [8, 32], strides = [1, 1]} : vector<8x128xf32> to vector<8x32xf32>
    %261 = arith.mulf %258, %244 : vector<8x32xf32>
    %262 = arith.mulf %257, %259 : vector<8x32xf32>
    %263 = arith.addf %261, %262 : vector<8x32xf32>
    %264 = math.tanh %263 : vector<8x32xf32>
    %265 = arith.mulf %260, %264 : vector<8x32xf32>
    %c32_93 = arith.constant 32 : index
    %c0_94 = arith.constant 0 : index
    %266 = vector.load %arg10[%c32_93, %c0_94] : memref<64x32xf32, #tpu.memory_space<vmem>>, vector<8x32xf32>
    tpu.vector_store %arg10[%c32_93, %c0_94], %265 {strides = array<i32>} : memref<64x32xf32, #tpu.memory_space<vmem>>, vector<8x32xf32>,
    %c40_95 = arith.constant 40 : index
    %c0_96 = arith.constant 0 : index
    %267 = vector.load %arg11[%c40_95, %c0_96] : memref<64x128xf32, #tpu.memory_space<vmem>>, vector<8x128xf32>
    %cst_97 = arith.constant dense<0.000000e+00> : vector<8x128xf32>
    %268 = tpu.matmul %265, %169, %cst_97 {dimension_numbers = #tpu.dot_dimension_numbers<[1], [0], [0], [1], [0, 0, 1, 1], [], []>} : vector<8x32xf32>, vector<32x128xf32>, vector<8x128xf32> -> vector<8x128xf32>
    %269 = arith.addf %267, %268 : vector<8x128xf32>
    %270 = arith.negf %269 : vector<8x128xf32>
    %271 = math.exp %270 : vector<8x128xf32>
    %cst_98 = arith.constant 1.000000e+00 : f32
    %272 = vector.broadcast %cst_98 : f32 to vector<8x128xf32>
    %273 = arith.addf %272, %271 : vector<8x128xf32>
    %274 = arith.divf %272, %273 : vector<8x128xf32>
    %275 = math.tanh %269 : vector<8x128xf32>
    %276 = vector.extract_strided_slice %274 {offsets = [0, 0], sizes = [8, 32], strides = [1, 1]} : vector<8x128xf32> to vector<8x32xf32>
    %277 = vector.extract_strided_slice %274 {offsets = [0, 32], sizes = [8, 32], strides = [1, 1]} : vector<8x128xf32> to vector<8x32xf32>
    %278 = vector.extract_strided_slice %275 {offsets = [0, 64], sizes = [8, 32], strides = [1, 1]} : vector<8x128xf32> to vector<8x32xf32>
    %279 = vector.extract_strided_slice %274 {offsets = [0, 96], sizes = [8, 32], strides = [1, 1]} : vector<8x128xf32> to vector<8x32xf32>
    %280 = arith.mulf %277, %263 : vector<8x32xf32>
    %281 = arith.mulf %276, %278 : vector<8x32xf32>
    %282 = arith.addf %280, %281 : vector<8x32xf32>
    %283 = math.tanh %282 : vector<8x32xf32>
    %284 = arith.mulf %279, %283 : vector<8x32xf32>
    %c40_99 = arith.constant 40 : index
    %c0_100 = arith.constant 0 : index
    %285 = vector.load %arg10[%c40_99, %c0_100] : memref<64x32xf32, #tpu.memory_space<vmem>>, vector<8x32xf32>
    tpu.vector_store %arg10[%c40_99, %c0_100], %284 {strides = array<i32>} : memref<64x32xf32, #tpu.memory_space<vmem>>, vector<8x32xf32>,
    %c48_101 = arith.constant 48 : index
    %c0_102 = arith.constant 0 : index
    %286 = vector.load %arg11[%c48_101, %c0_102] : memref<64x128xf32, #tpu.memory_space<vmem>>, vector<8x128xf32>
    %cst_103 = arith.constant dense<0.000000e+00> : vector<8x128xf32>
    %287 = tpu.matmul %284, %169, %cst_103 {dimension_numbers = #tpu.dot_dimension_numbers<[1], [0], [0], [1], [0, 0, 1, 1], [], []>} : vector<8x32xf32>, vector<32x128xf32>, vector<8x128xf32> -> vector<8x128xf32>
    %288 = arith.addf %286, %287 : vector<8x128xf32>
    %289 = arith.negf %288 : vector<8x128xf32>
    %290 = math.exp %289 : vector<8x128xf32>
    %cst_104 = arith.constant 1.000000e+00 : f32
    %291 = vector.broadcast %cst_104 : f32 to vector<8x128xf32>
    %292 = arith.addf %291, %290 : vector<8x128xf32>
    %293 = arith.divf %291, %292 : vector<8x128xf32>
    %294 = math.tanh %288 : vector<8x128xf32>
    %295 = vector.extract_strided_slice %293 {offsets = [0, 0], sizes = [8, 32], strides = [1, 1]} : vector<8x128xf32> to vector<8x32xf32>
    %296 = vector.extract_strided_slice %293 {offsets = [0, 32], sizes = [8, 32], strides = [1, 1]} : vector<8x128xf32> to vector<8x32xf32>
    %297 = vector.extract_strided_slice %294 {offsets = [0, 64], sizes = [8, 32], strides = [1, 1]} : vector<8x128xf32> to vector<8x32xf32>
    %298 = vector.extract_strided_slice %293 {offsets = [0, 96], sizes = [8, 32], strides = [1, 1]} : vector<8x128xf32> to vector<8x32xf32>
    %299 = arith.mulf %296, %282 : vector<8x32xf32>
    %300 = arith.mulf %295, %297 : vector<8x32xf32>
    %301 = arith.addf %299, %300 : vector<8x32xf32>
    %302 = math.tanh %301 : vector<8x32xf32>
    %303 = arith.mulf %298, %302 : vector<8x32xf32>
    %c48_105 = arith.constant 48 : index
    %c0_106 = arith.constant 0 : index
    %304 = vector.load %arg10[%c48_105, %c0_106] : memref<64x32xf32, #tpu.memory_space<vmem>>, vector<8x32xf32>
    tpu.vector_store %arg10[%c48_105, %c0_106], %303 {strides = array<i32>} : memref<64x32xf32, #tpu.memory_space<vmem>>, vector<8x32xf32>,
    %c56_107 = arith.constant 56 : index
    %c0_108 = arith.constant 0 : index
    %305 = vector.load %arg11[%c56_107, %c0_108] : memref<64x128xf32, #tpu.memory_space<vmem>>, vector<8x128xf32>
    %cst_109 = arith.constant dense<0.000000e+00> : vector<8x128xf32>
    %306 = tpu.matmul %303, %169, %cst_109 {dimension_numbers = #tpu.dot_dimension_numbers<[1], [0], [0], [1], [0, 0, 1, 1], [], []>} : vector<8x32xf32>, vector<32x128xf32>, vector<8x128xf32> -> vector<8x128xf32>
    %307 = arith.addf %305, %306 : vector<8x128xf32>
    %308 = arith.negf %307 : vector<8x128xf32>
    %309 = math.exp %308 : vector<8x128xf32>
    %cst_110 = arith.constant 1.000000e+00 : f32
    %310 = vector.broadcast %cst_110 : f32 to vector<8x128xf32>
    %311 = arith.addf %310, %309 : vector<8x128xf32>
    %312 = arith.divf %310, %311 : vector<8x128xf32>
    %313 = math.tanh %307 : vector<8x128xf32>
    %314 = vector.extract_strided_slice %312 {offsets = [0, 0], sizes = [8, 32], strides = [1, 1]} : vector<8x128xf32> to vector<8x32xf32>
    %315 = vector.extract_strided_slice %312 {offsets = [0, 32], sizes = [8, 32], strides = [1, 1]} : vector<8x128xf32> to vector<8x32xf32>
    %316 = vector.extract_strided_slice %313 {offsets = [0, 64], sizes = [8, 32], strides = [1, 1]} : vector<8x128xf32> to vector<8x32xf32>
    %317 = vector.extract_strided_slice %312 {offsets = [0, 96], sizes = [8, 32], strides = [1, 1]} : vector<8x128xf32> to vector<8x32xf32>
    %318 = arith.mulf %315, %301 : vector<8x32xf32>
    %319 = arith.mulf %314, %316 : vector<8x32xf32>
    %320 = arith.addf %318, %319 : vector<8x32xf32>
    %321 = math.tanh %320 : vector<8x32xf32>
    %322 = arith.mulf %317, %321 : vector<8x32xf32>
    %c56_111 = arith.constant 56 : index
    %c0_112 = arith.constant 0 : index
    %323 = vector.load %arg10[%c56_111, %c0_112] : memref<64x32xf32, #tpu.memory_space<vmem>>, vector<8x32xf32>
    tpu.vector_store %arg10[%c56_111, %c0_112], %322 {strides = array<i32>} : memref<64x32xf32, #tpu.memory_space<vmem>>, vector<8x32xf32>,
    %c0_113 = arith.constant 0 : index
    %c0_114 = arith.constant 0 : index
    %324 = vector.load %arg10[%c0_113, %c0_114] : memref<64x32xf32, #tpu.memory_space<vmem>>, vector<64x32xf32>
    %c0_115 = arith.constant 0 : index
    %c0_116 = arith.constant 0 : index
    %325 = vector.load %arg7[%c0_115, %c0_116] : memref<1x32xf32, #tpu.memory_space<vmem>>, vector<1x32xf32>
    %326 = vector.broadcast %325 : vector<1x32xf32> to vector<64x32xf32>
    %327 = arith.mulf %324, %326 : vector<64x32xf32>
    %cst_117 = arith.constant dense<0.000000e+00> : vector<64xf32>
    %328 = vector.multi_reduction <add>, %327, %cst_117 [1] : vector<64x32xf32> to vector<64xf32>
    %329 = vector.shape_cast %328 : vector<64xf32> to vector<64x1xf32>
    %c0_118 = arith.constant 0 : index
    %c0_119 = arith.constant 0 : index
    %330 = vector.load %arg8[%c0_118, %c0_119] : memref<1x1xf32, #tpu.memory_space<vmem>>, vector<1x1xf32>
    %331 = vector.broadcast %330 : vector<1x1xf32> to vector<64x1xf32>
    %332 = arith.addf %329, %331 : vector<64x1xf32>
    %c0_120 = arith.constant 0 : index
    %c0_121 = arith.constant 0 : index
    %333 = vector.load %arg9[%c0_120, %c0_121] : memref<64x1xf32, #tpu.memory_space<vmem>>, vector<64x1xf32>
    tpu.vector_store %arg9[%c0_120, %c0_121], %332 {strides = array<i32>} : memref<64x1xf32, #tpu.memory_space<vmem>>, vector<64x1xf32>,
    return
  }
}

</mosaic_0001>

<llo_original>
// kernel: lstm_model_forward.1
$region0: #{lstm_model_forward.1}
  #allocation0 [shape = 'u32[]', space=smem, size = 0x4, offset = 0x4, fixed_abs, tag = 'smem constant byte address 0x4 - core index']
  #allocation1 [shape = 'u32[72,128]{1,0:T(1,128)}', space=vmem, size = 0x9000, scoped, tag = 'internal scratch']
  #allocation2 [shape = 'f32[64,32]{1,0:T(8,128)}', space=vmem, size = 0x8000, scoped, tag = 'scratch operand']
  #allocation3 [shape = 'f32[64,128]{1,0:T(8,128)}', space=vmem, size = 0x8000, scoped, tag = 'scratch operand']
  #allocation4 [shape = 'f32[1,1]{1,0:T(1,128)S(1)}', space=vmem, size = 0x200, scoped, tag = 'scoped memory for lstm_model_forward.1']
  %s0 = inlined_call_operand.vmem [shape: f32[64,16], index: 0, kind: input, shape index: {}]
  %s1 = inlined_call_operand.vmem [shape: f32[16,128], index: 1, kind: input, shape index: {}]
  %s2 = inlined_call_operand.vmem [shape: f32[32,128], index: 2, kind: input, shape index: {}]
  %s3 = inlined_call_operand.vmem [shape: f32[1,128], index: 3, kind: input, shape index: {}]
  %s4 = inlined_call_operand.vmem [shape: f32[32,128], index: 4, kind: input, shape index: {}]
  %s5 = inlined_call_operand.vmem [shape: f32[32,128], index: 5, kind: input, shape index: {}]
  %s6 = inlined_call_operand.vmem [shape: f32[1,128], index: 6, kind: input, shape index: {}]
  %s7 = inlined_call_operand.vmem [shape: f32[1,32], index: 7, kind: input, shape index: {}]
  %s8 = inlined_call_operand.<no memory space> [shape: f32[1,1], index: 8, kind: input, shape index: {}]
  %s9 = inlined_call_operand.vmem [shape: f32[64,1], index: 9, kind: output, shape index: {}]
  %s10 = sld [smem:[#allocation0]]
  $region46: #{lstm_model_forward.1} parent=0
    _
  %s12 = ssub.s32 1, %s10
  %s13 = scalar_select 0, %s12, %s10
  %v14 = vstv %s8
  %15 = vst [vmem:[#allocation4] sm:$0x1] %v14
  // Predicated region
  $region2: #{lstm_model_forward.1} parent=0 // pred_check
    _
  $region3: #{lstm_model_forward.1} parent=0 // pred_check_branch
    %17 = sbr.rel (0) target = $region5
  $region4: #{lstm_model_forward.1} parent=0 // pred_region
    _
  $region5: #{lstm_model_forward.1} parent=0 // pred_fallthru
    _
  // Predicated region
  $region6: #{lstm_model_forward.1} parent=0 // pred_check
    _
  $region7: #{lstm_model_forward.1} parent=0 // pred_check_branch
    %19 = sbr.rel (0) target = $region9
  $region8: #{lstm_model_forward.1} parent=0 // pred_region
    _
  $region9: #{lstm_model_forward.1} parent=0 // pred_fallthru
    _
  // Predicated region
  $region10: #{lstm_model_forward.1} parent=0 // pred_check
    _
  $region11: #{lstm_model_forward.1} parent=0 // pred_check_branch
    %21 = sbr.rel (0) target = $region13
  $region12: #{lstm_model_forward.1} parent=0 // pred_region
    _
  $region13: #{lstm_model_forward.1} parent=0 // pred_fallthru
    _
  // Predicated region
  $region14: #{lstm_model_forward.1} parent=0 // pred_check
    _
  $region15: #{lstm_model_forward.1} parent=0 // pred_check_branch
    %23 = sbr.rel (0) target = $region17
  $region16: #{lstm_model_forward.1} parent=0 // pred_region
    _
  $region17: #{lstm_model_forward.1} parent=0 // pred_fallthru
    _
  // Predicated region
  $region18: #{lstm_model_forward.1} parent=0 // pred_check
    _
  $region19: #{lstm_model_forward.1} parent=0 // pred_check_branch
    %25 = sbr.rel (0) target = $region21
  $region20: #{lstm_model_forward.1} parent=0 // pred_region
    _
  $region21: #{lstm_model_forward.1} parent=0 // pred_fallthru
    _
  // Predicated region
  $region22: #{lstm_model_forward.1} parent=0 // pred_check
    _
  $region23: #{lstm_model_forward.1} parent=0 // pred_check_branch
    %27 = sbr.rel (0) target = $region25
  $region24: #{lstm_model_forward.1} parent=0 // pred_region
    _
  $region25: #{lstm_model_forward.1} parent=0 // pred_fallthru
    _
  // Predicated region
  $region26: #{lstm_model_forward.1} parent=0 // pred_check
    _
  $region27: #{lstm_model_forward.1} parent=0 // pred_check_branch
    %29 = sbr.rel (0) target = $region29
  $region28: #{lstm_model_forward.1} parent=0 // pred_region
    _
  $region29: #{lstm_model_forward.1} parent=0 // pred_fallthru
    _
  // Predicated region
  $region30: #{lstm_model_forward.1} parent=0 // pred_check
    _
  $region31: #{lstm_model_forward.1} parent=0 // pred_check_branch
    %31 = sbr.rel (0) target = $region33
  $region32: #{lstm_model_forward.1} parent=0 // pred_region
    _
  $region33: #{lstm_model_forward.1} parent=0 // pred_fallthru
    _
  // Predicated region
  $region34: #{lstm_model_forward.1} parent=0 // pred_check
    _
  $region35: #{lstm_model_forward.1} parent=0 // pred_check_branch
    %33 = sbr.rel (0) target = $region37
  $region36: #{lstm_model_forward.1} parent=0 // pred_region
    _
  $region37: #{lstm_model_forward.1} parent=0 // pred_fallthru
    _
  %v34 = vld [vmem:[%s0] sm:$0xff]
  %v35 = vld [vmem:[%s0 + $0x8] sm:$0xff]
  %v36 = vld [vmem:[%s0 + $0x10] sm:$0xff]
  %v37 = vld [vmem:[%s0 + $0x18] sm:$0xff]
  %v38 = vld [vmem:[%s0 + $0x20] sm:$0xff]
  %v39 = vld [vmem:[%s0 + $0x28] sm:$0xff]
  %v40 = vld [vmem:[%s0 + $0x30] sm:$0xff]
  %v41 = vld [vmem:[%s0 + $0x38] sm:$0xff]
  %v42 = vld [vmem:[%s1] sm:$0xff]
  %v43 = vld [vmem:[%s1 + $0x8] sm:$0xff]
  %v44 = vld [vmem:[%s3] sm:$0x1]
  %v46 = vperm.slane %v44, 0
  %vm48 = vcmask 130048
  %v50 = vsel %vm48, %v34, 0
  %v53 = vsel %vm48, %v35, 0
  %v56 = vsel %vm48, %v36, 0
  %v59 = vsel %vm48, %v37, 0
  %v62 = vsel %vm48, %v38, 0
  %v65 = vsel %vm48, %v39, 0
  %v68 = vsel %vm48, %v40, 0
  %v71 = vsel %vm48, %v41, 0
  %73 = vmatpush.msra.mxu0 0.0
  %74 = vmatpush.msra.mxu0 0.0
  %75 = vmatpush.msra.mxu0 0.0
  %76 = vmatpush.msra.mxu0 0.0
  %77 = vmatpush.msra.mxu0 0.0
  %78 = vmatpush.msra.mxu0 0.0
  %79 = vmatpush.msra.mxu0 0.0
  %80 = vmatpush.msra.mxu0 0.0
  %81 = vmatpush.msra.mxu0 0.0
  %82 = vmatpush.msra.mxu0 0.0
  %83 = vmatpush.msra.mxu0 0.0
  %84 = vmatpush.msra.mxu0 0.0
  %85 = vmatpush.msra.mxu0 0.0
  %86 = vmatpush.msra.mxu0 0.0
  %87 = vmatpush.msra.mxu0 %v43
  %88 = vmatpush.msra.mxu0 %v42
  %89 = vmatmul.f32.gmra.mxu0 %v50
  %v90 = vpop.f32.mrf.mxu0
  %v91 = vadd.f32 %v46, %v90
  %92 = vmatmul.f32.gmra.mxu0 %v53
  %v93 = vpop.f32.mrf.mxu0
  %v94 = vadd.f32 %v46, %v93
  %95 = vmatmul.f32.gmra.mxu0 %v56
  %v96 = vpop.f32.mrf.mxu0
  %v97 = vadd.f32 %v46, %v96
  %98 = vmatmul.f32.gmra.mxu0 %v59
  %v99 = vpop.f32.mrf.mxu0
  %v100 = vadd.f32 %v46, %v99
  %101 = vmatmul.f32.gmra.mxu0 %v62
  %v102 = vpop.f32.mrf.mxu0
  %v103 = vadd.f32 %v46, %v102
  %104 = vmatmul.f32.gmra.mxu0 %v65
  %v105 = vpop.f32.mrf.mxu0
  %v106 = vadd.f32 %v46, %v105
  %107 = vmatmul.f32.gmra.mxu0 %v68
  %v108 = vpop.f32.mrf.mxu0
  %v109 = vadd.f32 %v46, %v108
  %110 = vmatmul.f32.gmra.mxu0 %v71
  %v111 = vpop.f32.mrf.mxu0
  %v112 = vadd.f32 %v46, %v111
  %113 = vdwg.mxu0
  %114 = vst [vmem:[#allocation3] sm:$0xff] %v91
  %115 = vst [vmem:[#allocation3 + $0x8] sm:$0xff] %v94
  %116 = vst [vmem:[#allocation3 + $0x10] sm:$0xff] %v97
  %117 = vst [vmem:[#allocation3 + $0x18] sm:$0xff] %v100
  %118 = vst [vmem:[#allocation3 + $0x20] sm:$0xff] %v103
  %119 = vst [vmem:[#allocation3 + $0x28] sm:$0xff] %v106
  %120 = vst [vmem:[#allocation3 + $0x30] sm:$0xff] %v109
  %121 = vst [vmem:[#allocation3 + $0x38] sm:$0xff] %v112
  %v122 = vld [vmem:[%s2] sm:$0xff]
  %v123 = vld [vmem:[%s2 + $0x8] sm:$0xff]
  %v124 = vld [vmem:[%s2 + $0x10] sm:$0xff]
  %v125 = vld [vmem:[%s2 + $0x18] sm:$0xff]
  %v126 = vld [vmem:[#allocation3] sm:$0xff]
  %vm127 = vcmask 261120
  %v129 = vsel %vm127, 0.0, 0
  %131 = vmatpush.msra.mxu0 0.0
  %132 = vmatpush.msra.mxu0 0.0
  %133 = vmatpush.msra.mxu0 0.0
  %134 = vmatpush.msra.mxu0 0.0
  %135 = vmatpush.msra.mxu0 0.0
  %136 = vmatpush.msra.mxu0 0.0
  %137 = vmatpush.msra.mxu0 0.0
  %138 = vmatpush.msra.mxu0 0.0
  %139 = vmatpush.msra.mxu0 0.0
  %140 = vmatpush.msra.mxu0 0.0
  %141 = vmatpush.msra.mxu0 0.0
  %142 = vmatpush.msra.mxu0 0.0
  %143 = vmatpush.msra.mxu0 %v125
  %144 = vmatpush.msra.mxu0 %v124
  %145 = vmatpush.msra.mxu0 %v123
  %146 = vmatpush.msra.mxu0 %v122
  %147 = vmatmul.f32.gmra.mxu0 %v129
  %v148 = vpop.f32.mrf.mxu0
  %v149 = vadd.f32 0.0, %v148
  %150 = vdwg.mxu0
  %v151 = vadd.f32 %v126, %v149
  %v152 = vxor.u32 %v151, 2147483648
  %v153 = vmul.f32 %v152, 1.442695
  %v154 = vpow.pop %v153
  %v155 = vadd.f32 %v154, 1.0
  %v156 = vrcp.pop %v155
  %v157 = vmul.f32 %v155, %v156
  %v158 = vsub.f32 1.0, %v157
  %v159 = vmul.f32 %v156, %v158
  %v160 = vadd.f32 %v156, %v159
  %vm161 = vweird.f32 %v155
  %vm162 = vweird.f32 %v156
  %vm163 = vmor %vm161, %vm162
  %v164 = vsel %vm163, %v156, %v160
  %v165 = vand.u32 2147483647, %v155
  %vm166 = vcmp.eq.f32.partialorder %v165, 8.507059e+37
  %v167 = vand.u32 %v155, 2147483648
  %v168 = vor.u32 1.1754944e-38, %v167
  %v169 = vsel %vm166, %v168, %v164
  %v170 = vmul.f32 1.0, %v169
  %v171 = vtanh.pop %v151
  %v172 = vmul.f32 %v170, 0.0
  %174 = vrot.lane.b32.xlu0 %v171, 64
  %v175 = vpop.permute.xlu0 %174
  %v177 = vmul.f32 %v170, %v175
  %179 = vrot.lane.b32.xlu0 %v177, 32
  %v180 = vpop.permute.xlu0 %179
  %v182 = vadd.f32 %v172, %v180
  %v183 = vtanh.pop %v182
  %185 = vrot.lane.b32.xlu0 %v183, 64
  %v186 = vpop.permute.xlu0 %185
  %v188 = vmul.f32 %v170, %v186
  %190 = vrot.lane.b32.xlu0 %v188, 32
  %v191 = vpop.permute.xlu0 %190
  %193 = vst.msk [vmem:[#allocation2] sm:$0xff] %vm127, %v191
  %v194 = vld [vmem:[#allocation3 + $0x8] sm:$0xff]
  %v195 = vsel %vm127, %v191, 0
  %197 = vmatpush.msra.mxu0 0.0
  %198 = vmatpush.msra.mxu0 0.0
  %199 = vmatpush.msra.mxu0 0.0
  %200 = vmatpush.msra.mxu0 0.0
  %201 = vmatpush.msra.mxu0 0.0
  %202 = vmatpush.msra.mxu0 0.0
  %203 = vmatpush.msra.mxu0 0.0
  %204 = vmatpush.msra.mxu0 0.0
  %205 = vmatpush.msra.mxu0 0.0
  %206 = vmatpush.msra.mxu0 0.0
  %207 = vmatpush.msra.mxu0 0.0
  %208 = vmatpush.msra.mxu0 0.0
  %209 = vmatpush.msra.mxu0 %v125
  %210 = vmatpush.msra.mxu0 %v124
  %211 = vmatpush.msra.mxu0 %v123
  %212 = vmatpush.msra.mxu0 %v122
  %213 = vmatmul.f32.gmra.mxu0 %v195
  %v214 = vpop.f32.mrf.mxu0
  %v215 = vadd.f32 0.0, %v214
  %216 = vdwg.mxu0
  %v217 = vadd.f32 %v194, %v215
  %v218 = vxor.u32 %v217, 2147483648
  %v219 = vmul.f32 %v218, 1.442695
  %v220 = vpow.pop %v219
  %v221 = vadd.f32 %v220, 1.0
  %v222 = vrcp.pop %v221
  %v223 = vmul.f32 %v221, %v222
  %v224 = vsub.f32 1.0, %v223
  %v225 = vmul.f32 %v222, %v224
  %v226 = vadd.f32 %v222, %v225
  %vm227 = vweird.f32 %v221
  %vm228 = vweird.f32 %v222
  %vm229 = vmor %vm227, %vm228
  %v230 = vsel %vm229, %v222, %v226
  %v231 = vand.u32 2147483647, %v221
  %vm232 = vcmp.eq.f32.partialorder %v231, 8.507059e+37
  %v233 = vand.u32 %v221, 2147483648
  %v234 = vor.u32 1.1754944e-38, %v233
  %v235 = vsel %vm232, %v234, %v230
  %v236 = vmul.f32 1.0, %v235
  %v237 = vtanh.pop %v217
  %v238 = vmul.f32 %v236, %v182
  %240 = vrot.lane.b32.xlu0 %v237, 64
  %v241 = vpop.permute.xlu0 %240
  %v243 = vmul.f32 %v236, %v241
  %245 = vrot.lane.b32.xlu0 %v243, 32
  %v246 = vpop.permute.xlu0 %245
  %v248 = vadd.f32 %v238, %v246
  %v249 = vtanh.pop %v248
  %251 = vrot.lane.b32.xlu0 %v249, 64
  %v252 = vpop.permute.xlu0 %251
  %v254 = vmul.f32 %v236, %v252
  %256 = vrot.lane.b32.xlu0 %v254, 32
  %v257 = vpop.permute.xlu0 %256
  %259 = vst.msk [vmem:[#allocation2 + $0x8] sm:$0xff] %vm127, %v257
  %v260 = vld [vmem:[#allocation3 + $0x10] sm:$0xff]
  %v261 = vsel %vm127, %v257, 0
  %263 = vmatpush.msra.mxu0 0.0
  %264 = vmatpush.msra.mxu0 0.0
  %265 = vmatpush.msra.mxu0 0.0
  %266 = vmatpush.msra.mxu0 0.0
  %267 = vmatpush.msra.mxu0 0.0
  %268 = vmatpush.msra.mxu0 0.0
  %269 = vmatpush.msra.mxu0 0.0
  %270 = vmatpush.msra.mxu0 0.0
  %271 = vmatpush.msra.mxu0 0.0
  %272 = vmatpush.msra.mxu0 0.0
  %273 = vmatpush.msra.mxu0 0.0
  %274 = vmatpush.msra.mxu0 0.0
  %275 = vmatpush.msra.mxu0 %v125
  %276 = vmatpush.msra.mxu0 %v124
  %277 = vmatpush.msra.mxu0 %v123
  %278 = vmatpush.msra.mxu0 %v122
  %279 = vmatmul.f32.gmra.mxu0 %v261
  %v280 = vpop.f32.mrf.mxu0
  %v281 = vadd.f32 0.0, %v280
  %282 = vdwg.mxu0
  %v283 = vadd.f32 %v260, %v281
  %v284 = vxor.u32 %v283, 2147483648
  %v285 = vmul.f32 %v284, 1.442695
  %v286 = vpow.pop %v285
  %v287 = vadd.f32 %v286, 1.0
  %v288 = vrcp.pop %v287
  %v289 = vmul.f32 %v287, %v288
  %v290 = vsub.f32 1.0, %v289
  %v291 = vmul.f32 %v288, %v290
  %v292 = vadd.f32 %v288, %v291
  %vm293 = vweird.f32 %v287
  %vm294 = vweird.f32 %v288
  %vm295 = vmor %vm293, %vm294
  %v296 = vsel %vm295, %v288, %v292
  %v297 = vand.u32 2147483647, %v287
  %vm298 = vcmp.eq.f32.partialorder %v297, 8.507059e+37
  %v299 = vand.u32 %v287, 2147483648
  %v300 = vor.u32 1.1754944e-38, %v299
  %v301 = vsel %vm298, %v300, %v296
  %v302 = vmul.f32 1.0, %v301
  %v303 = vtanh.pop %v283
  %v304 = vmul.f32 %v302, %v248
  %306 = vrot.lane.b32.xlu0 %v303, 64
  %v307 = vpop.permute.xlu0 %306
  %v309 = vmul.f32 %v302, %v307
  %311 = vrot.lane.b32.xlu0 %v309, 32
  %v312 = vpop.permute.xlu0 %311
  %v314 = vadd.f32 %v304, %v312
  %v315 = vtanh.pop %v314
  %317 = vrot.lane.b32.xlu0 %v315, 64
  %v318 = vpop.permute.xlu0 %317
  %v320 = vmul.f32 %v302, %v318
  %322 = vrot.lane.b32.xlu0 %v320, 32
  %v323 = vpop.permute.xlu0 %322
  %325 = vst.msk [vmem:[#allocation2 + $0x10] sm:$0xff] %vm127, %v323
  %v326 = vld [vmem:[#allocation3 + $0x18] sm:$0xff]
  %v327 = vsel %vm127, %v323, 0
  %329 = vmatpush.msra.mxu0 0.0
  %330 = vmatpush.msra.mxu0 0.0
  %331 = vmatpush.msra.mxu0 0.0
  %332 = vmatpush.msra.mxu0 0.0
  %333 = vmatpush.msra.mxu0 0.0
  %334 = vmatpush.msra.mxu0 0.0
  %335 = vmatpush.msra.mxu0 0.0
  %336 = vmatpush.msra.mxu0 0.0
  %337 = vmatpush.msra.mxu0 0.0
  %338 = vmatpush.msra.mxu0 0.0
  %339 = vmatpush.msra.mxu0 0.0
  %340 = vmatpush.msra.mxu0 0.0
  %341 = vmatpush.msra.mxu0 %v125
  %342 = vmatpush.msra.mxu0 %v124
  %343 = vmatpush.msra.mxu0 %v123
  %344 = vmatpush.msra.mxu0 %v122
  %345 = vmatmul.f32.gmra.mxu0 %v327
  %v346 = vpop.f32.mrf.mxu0
  %v347 = vadd.f32 0.0, %v346
  %348 = vdwg.mxu0
  %v349 = vadd.f32 %v326, %v347
  %v350 = vxor.u32 %v349, 2147483648
  %v351 = vmul.f32 %v350, 1.442695
  %v352 = vpow.pop %v351
  %v353 = vadd.f32 %v352, 1.0
  %v354 = vrcp.pop %v353
  %v355 = vmul.f32 %v353, %v354
  %v356 = vsub.f32 1.0, %v355
  %v357 = vmul.f32 %v354, %v356
  %v358 = vadd.f32 %v354, %v357
  %vm359 = vweird.f32 %v353
  %vm360 = vweird.f32 %v354
  %vm361 = vmor %vm359, %vm360
  %v362 = vsel %vm361, %v354, %v358
  %v363 = vand.u32 2147483647, %v353
  %vm364 = vcmp.eq.f32.partialorder %v363, 8.507059e+37
  %v365 = vand.u32 %v353, 2147483648
  %v366 = vor.u32 1.1754944e-38, %v365
  %v367 = vsel %vm364, %v366, %v362
  %v368 = vmul.f32 1.0, %v367
  %v369 = vtanh.pop %v349
  %v370 = vmul.f32 %v368, %v314
  %372 = vrot.lane.b32.xlu0 %v369, 64
  %v373 = vpop.permute.xlu0 %372
  %v375 = vmul.f32 %v368, %v373
  %377 = vrot.lane.b32.xlu0 %v375, 32
  %v378 = vpop.permute.xlu0 %377
  %v380 = vadd.f32 %v370, %v378
  %v381 = vtanh.pop %v380
  %383 = vrot.lane.b32.xlu0 %v381, 64
  %v384 = vpop.permute.xlu0 %383
  %v386 = vmul.f32 %v368, %v384
  %388 = vrot.lane.b32.xlu0 %v386, 32
  %v389 = vpop.permute.xlu0 %388
  %391 = vst.msk [vmem:[#allocation2 + $0x18] sm:$0xff] %vm127, %v389
  %v392 = vld [vmem:[#allocation3 + $0x20] sm:$0xff]
  %v393 = vsel %vm127, %v389, 0
  %395 = vmatpush.msra.mxu0 0.0
  %396 = vmatpush.msra.mxu0 0.0
  %397 = vmatpush.msra.mxu0 0.0
  %398 = vmatpush.msra.mxu0 0.0
  %399 = vmatpush.msra.mxu0 0.0
  %400 = vmatpush.msra.mxu0 0.0
  %401 = vmatpush.msra.mxu0 0.0
  %402 = vmatpush.msra.mxu0 0.0
  %403 = vmatpush.msra.mxu0 0.0
  %404 = vmatpush.msra.mxu0 0.0
  %405 = vmatpush.msra.mxu0 0.0
  %406 = vmatpush.msra.mxu0 0.0
  %407 = vmatpush.msra.mxu0 %v125
  %408 = vmatpush.msra.mxu0 %v124
  %409 = vmatpush.msra.mxu0 %v123
  %410 = vmatpush.msra.mxu0 %v122
  %411 = vmatmul.f32.gmra.mxu0 %v393
  %v412 = vpop.f32.mrf.mxu0
  %v413 = vadd.f32 0.0, %v412
  %414 = vdwg.mxu0
  %v415 = vadd.f32 %v392, %v413
  %v416 = vxor.u32 %v415, 2147483648
  %v417 = vmul.f32 %v416, 1.442695
  %v418 = vpow.pop %v417
  %v419 = vadd.f32 %v418, 1.0
  %v420 = vrcp.pop %v419
  %v421 = vmul.f32 %v419, %v420
  %v422 = vsub.f32 1.0, %v421
  %v423 = vmul.f32 %v420, %v422
  %v424 = vadd.f32 %v420, %v423
  %vm425 = vweird.f32 %v419
  %vm426 = vweird.f32 %v420
  %vm427 = vmor %vm425, %vm426
  %v428 = vsel %vm427, %v420, %v424
  %v429 = vand.u32 2147483647, %v419
  %vm430 = vcmp.eq.f32.partialorder %v429, 8.507059e+37
  %v431 = vand.u32 %v419, 2147483648
  %v432 = vor.u32 1.1754944e-38, %v431
  %v433 = vsel %vm430, %v432, %v428
  %v434 = vmul.f32 1.0, %v433
  %v435 = vtanh.pop %v415
  %v436 = vmul.f32 %v434, %v380
  %438 = vrot.lane.b32.xlu0 %v435, 64
  %v439 = vpop.permute.xlu0 %438
  %v441 = vmul.f32 %v434, %v439
  %443 = vrot.lane.b32.xlu0 %v441, 32
  %v444 = vpop.permute.xlu0 %443
  %v446 = vadd.f32 %v436, %v444
  %v447 = vtanh.pop %v446
  %449 = vrot.lane.b32.xlu0 %v447, 64
  %v450 = vpop.permute.xlu0 %449
  %v452 = vmul.f32 %v434, %v450
  %454 = vrot.lane.b32.xlu0 %v452, 32
  %v455 = vpop.permute.xlu0 %454
  %457 = vst.msk [vmem:[#allocation2 + $0x20] sm:$0xff] %vm127, %v455
  %v458 = vld [vmem:[#allocation3 + $0x28] sm:$0xff]
  %v459 = vsel %vm127, %v455, 0
  %461 = vmatpush.msra.mxu0 0.0
  %462 = vmatpush.msra.mxu0 0.0
  %463 = vmatpush.msra.mxu0 0.0
  %464 = vmatpush.msra.mxu0 0.0
  %465 = vmatpush.msra.mxu0 0.0
  %466 = vmatpush.msra.mxu0 0.0
  %467 = vmatpush.msra.mxu0 0.0
  %468 = vmatpush.msra.mxu0 0.0
  %469 = vmatpush.msra.mxu0 0.0
  %470 = vmatpush.msra.mxu0 0.0
  %471 = vmatpush.msra.mxu0 0.0
  %472 = vmatpush.msra.mxu0 0.0
  %473 = vmatpush.msra.mxu0 %v125
  %474 = vmatpush.msra.mxu0 %v124
  %475 = vmatpush.msra.mxu0 %v123
  %476 = vmatpush.msra.mxu0 %v122
  %477 = vmatmul.f32.gmra.mxu0 %v459
  %v478 = vpop.f32.mrf.mxu0
  %v479 = vadd.f32 0.0, %v478
  %480 = vdwg.mxu0
  %v481 = vadd.f32 %v458, %v479
  %v482 = vxor.u32 %v481, 2147483648
  %v483 = vmul.f32 %v482, 1.442695
  %v484 = vpow.pop %v483
  %v485 = vadd.f32 %v484, 1.0
  %v486 = vrcp.pop %v485
  %v487 = vmul.f32 %v485, %v486
  %v488 = vsub.f32 1.0, %v487
  %v489 = vmul.f32 %v486, %v488
  %v490 = vadd.f32 %v486, %v489
  %vm491 = vweird.f32 %v485
  %vm492 = vweird.f32 %v486
  %vm493 = vmor %vm491, %vm492
  %v494 = vsel %vm493, %v486, %v490
  %v495 = vand.u32 2147483647, %v485
  %vm496 = vcmp.eq.f32.partialorder %v495, 8.507059e+37
  %v497 = vand.u32 %v485, 2147483648
  %v498 = vor.u32 1.1754944e-38, %v497
  %v499 = vsel %vm496, %v498, %v494
  %v500 = vmul.f32 1.0, %v499
  %v501 = vtanh.pop %v481
  %v502 = vmul.f32 %v500, %v446
  %504 = vrot.lane.b32.xlu0 %v501, 64
  %v505 = vpop.permute.xlu0 %504
  %v507 = vmul.f32 %v500, %v505
  %509 = vrot.lane.b32.xlu0 %v507, 32
  %v510 = vpop.permute.xlu0 %509
  %v512 = vadd.f32 %v502, %v510
  %v513 = vtanh.pop %v512
  %515 = vrot.lane.b32.xlu0 %v513, 64
  %v516 = vpop.permute.xlu0 %515
  %v518 = vmul.f32 %v500, %v516
  %520 = vrot.lane.b32.xlu0 %v518, 32
  %v521 = vpop.permute.xlu0 %520
  %523 = vst.msk [vmem:[#allocation2 + $0x28] sm:$0xff] %vm127, %v521
  %v524 = vld [vmem:[#allocation3 + $0x30] sm:$0xff]
  %v525 = vsel %vm127, %v521, 0
  %527 = vmatpush.msra.mxu0 0.0
  %528 = vmatpush.msra.mxu0 0.0
  %529 = vmatpush.msra.mxu0 0.0
  %530 = vmatpush.msra.mxu0 0.0
  %531 = vmatpush.msra.mxu0 0.0
  %532 = vmatpush.msra.mxu0 0.0
  %533 = vmatpush.msra.mxu0 0.0
  %534 = vmatpush.msra.mxu0 0.0
  %535 = vmatpush.msra.mxu0 0.0
  %536 = vmatpush.msra.mxu0 0.0
  %537 = vmatpush.msra.mxu0 0.0
  %538 = vmatpush.msra.mxu0 0.0
  %539 = vmatpush.msra.mxu0 %v125
  %540 = vmatpush.msra.mxu0 %v124
  %541 = vmatpush.msra.mxu0 %v123
  %542 = vmatpush.msra.mxu0 %v122
  %543 = vmatmul.f32.gmra.mxu0 %v525
  %v544 = vpop.f32.mrf.mxu0
  %v545 = vadd.f32 0.0, %v544
  %546 = vdwg.mxu0
  %v547 = vadd.f32 %v524, %v545
  %v548 = vxor.u32 %v547, 2147483648
  %v549 = vmul.f32 %v548, 1.442695
  %v550 = vpow.pop %v549
  %v551 = vadd.f32 %v550, 1.0
  %v552 = vrcp.pop %v551
  %v553 = vmul.f32 %v551, %v552
  %v554 = vsub.f32 1.0, %v553
  %v555 = vmul.f32 %v552, %v554
  %v556 = vadd.f32 %v552, %v555
  %vm557 = vweird.f32 %v551
  %vm558 = vweird.f32 %v552
  %vm559 = vmor %vm557, %vm558
  %v560 = vsel %vm559, %v552, %v556
  %v561 = vand.u32 2147483647, %v551
  %vm562 = vcmp.eq.f32.partialorder %v561, 8.507059e+37
  %v563 = vand.u32 %v551, 2147483648
  %v564 = vor.u32 1.1754944e-38, %v563
  %v565 = vsel %vm562, %v564, %v560
  %v566 = vmul.f32 1.0, %v565
  %v567 = vtanh.pop %v547
  %v568 = vmul.f32 %v566, %v512
  %570 = vrot.lane.b32.xlu0 %v567, 64
  %v571 = vpop.permute.xlu0 %570
  %v573 = vmul.f32 %v566, %v571
  %575 = vrot.lane.b32.xlu0 %v573, 32
  %v576 = vpop.permute.xlu0 %575
  %v578 = vadd.f32 %v568, %v576
  %v579 = vtanh.pop %v578
  %581 = vrot.lane.b32.xlu0 %v579, 64
  %v582 = vpop.permute.xlu0 %581
  %v584 = vmul.f32 %v566, %v582
  %586 = vrot.lane.b32.xlu0 %v584, 32
  %v587 = vpop.permute.xlu0 %586
  %589 = vst.msk [vmem:[#allocation2 + $0x30] sm:$0xff] %vm127, %v587
  %v590 = vld [vmem:[#allocation3 + $0x38] sm:$0xff]
  %v591 = vsel %vm127, %v587, 0
  %593 = vmatpush.msra.mxu0 0.0
  %594 = vmatpush.msra.mxu0 0.0
  %595 = vmatpush.msra.mxu0 0.0
  %596 = vmatpush.msra.mxu0 0.0
  %597 = vmatpush.msra.mxu0 0.0
  %598 = vmatpush.msra.mxu0 0.0
  %599 = vmatpush.msra.mxu0 0.0
  %600 = vmatpush.msra.mxu0 0.0
  %601 = vmatpush.msra.mxu0 0.0
  %602 = vmatpush.msra.mxu0 0.0
  %603 = vmatpush.msra.mxu0 0.0
  %604 = vmatpush.msra.mxu0 0.0
  %605 = vmatpush.msra.mxu0 %v125
  %606 = vmatpush.msra.mxu0 %v124
  %607 = vmatpush.msra.mxu0 %v123
  %608 = vmatpush.msra.mxu0 %v122
  %609 = vmatmul.f32.gmra.mxu0 %v591
  %v610 = vpop.f32.mrf.mxu0
  %v611 = vadd.f32 0.0, %v610
  %612 = vdwg.mxu0
  %v613 = vadd.f32 %v590, %v611
  %v614 = vxor.u32 %v613, 2147483648
  %v615 = vmul.f32 %v614, 1.442695
  %v616 = vpow.pop %v615
  %v617 = vadd.f32 %v616, 1.0
  %v618 = vrcp.pop %v617
  %v619 = vmul.f32 %v617, %v618
  %v620 = vsub.f32 1.0, %v619
  %v621 = vmul.f32 %v618, %v620
  %v622 = vadd.f32 %v618, %v621
  %vm623 = vweird.f32 %v617
  %vm624 = vweird.f32 %v618
  %vm625 = vmor %vm623, %vm624
  %v626 = vsel %vm625, %v618, %v622
  %v627 = vand.u32 2147483647, %v617
  %vm628 = vcmp.eq.f32.partialorder %v627, 8.507059e+37
  %v629 = vand.u32 %v617, 2147483648
  %v630 = vor.u32 1.1754944e-38, %v629
  %v631 = vsel %vm628, %v630, %v626
  %v632 = vmul.f32 1.0, %v631
  %v633 = vtanh.pop %v613
  %v634 = vmul.f32 %v632, %v578
  %636 = vrot.lane.b32.xlu0 %v633, 64
  %v637 = vpop.permute.xlu0 %636
  %v639 = vmul.f32 %v632, %v637
  %641 = vrot.lane.b32.xlu0 %v639, 32
  %v642 = vpop.permute.xlu0 %641
  %v644 = vadd.f32 %v634, %v642
  %v645 = vtanh.pop %v644
  %647 = vrot.lane.b32.xlu0 %v645, 64
  %v648 = vpop.permute.xlu0 %647
  %v650 = vmul.f32 %v632, %v648
  %652 = vrot.lane.b32.xlu0 %v650, 32
  %v653 = vpop.permute.xlu0 %652
  %655 = vst.msk [vmem:[#allocation2 + $0x38] sm:$0xff] %vm127, %v653
  %v656 = vld [vmem:[#allocation2] sm:$0xff]
  %v657 = vld [vmem:[#allocation2 + $0x8] sm:$0xff]
  %v658 = vld [vmem:[#allocation2 + $0x10] sm:$0xff]
  %v659 = vld [vmem:[#allocation2 + $0x18] sm:$0xff]
  %v660 = vld [vmem:[#allocation2 + $0x20] sm:$0xff]
  %v661 = vld [vmem:[#allocation2 + $0x28] sm:$0xff]
  %v662 = vld [vmem:[#allocation2 + $0x30] sm:$0xff]
  %v663 = vld [vmem:[#allocation2 + $0x38] sm:$0xff]
  %v664 = vld [vmem:[%s4] sm:$0xff]
  %v665 = vld [vmem:[%s4 + $0x8] sm:$0xff]
  %v666 = vld [vmem:[%s4 + $0x10] sm:$0xff]
  %v667 = vld [vmem:[%s4 + $0x18] sm:$0xff]
  %v668 = vld [vmem:[%s6] sm:$0x1]
  %v670 = vperm.slane %v668, 0
  %v673 = vsel %vm127, %v656, 0
  %v676 = vsel %vm127, %v657, 0
  %v679 = vsel %vm127, %v658, 0
  %v682 = vsel %vm127, %v659, 0
  %v685 = vsel %vm127, %v660, 0
  %v688 = vsel %vm127, %v661, 0
  %v691 = vsel %vm127, %v662, 0
  %v694 = vsel %vm127, %v663, 0
  %696 = vmatpush.msra.mxu0 0.0
  %697 = vmatpush.msra.mxu0 0.0
  %698 = vmatpush.msra.mxu0 0.0
  %699 = vmatpush.msra.mxu0 0.0
  %700 = vmatpush.msra.mxu0 0.0
  %701 = vmatpush.msra.mxu0 0.0
  %702 = vmatpush.msra.mxu0 0.0
  %703 = vmatpush.msra.mxu0 0.0
  %704 = vmatpush.msra.mxu0 0.0
  %705 = vmatpush.msra.mxu0 0.0
  %706 = vmatpush.msra.mxu0 0.0
  %707 = vmatpush.msra.mxu0 0.0
  %708 = vmatpush.msra.mxu0 %v667
  %709 = vmatpush.msra.mxu0 %v666
  %710 = vmatpush.msra.mxu0 %v665
  %711 = vmatpush.msra.mxu0 %v664
  %712 = vmatmul.f32.gmra.mxu0 %v673
  %v713 = vpop.f32.mrf.mxu0
  %v714 = vadd.f32 %v670, %v713
  %715 = vmatmul.f32.gmra.mxu0 %v676
  %v716 = vpop.f32.mrf.mxu0
  %v717 = vadd.f32 %v670, %v716
  %718 = vmatmul.f32.gmra.mxu0 %v679
  %v719 = vpop.f32.mrf.mxu0
  %v720 = vadd.f32 %v670, %v719
  %721 = vmatmul.f32.gmra.mxu0 %v682
  %v722 = vpop.f32.mrf.mxu0
  %v723 = vadd.f32 %v670, %v722
  %724 = vmatmul.f32.gmra.mxu0 %v685
  %v725 = vpop.f32.mrf.mxu0
  %v726 = vadd.f32 %v670, %v725
  %727 = vmatmul.f32.gmra.mxu0 %v688
  %v728 = vpop.f32.mrf.mxu0
  %v729 = vadd.f32 %v670, %v728
  %730 = vmatmul.f32.gmra.mxu0 %v691
  %v731 = vpop.f32.mrf.mxu0
  %v732 = vadd.f32 %v670, %v731
  %733 = vmatmul.f32.gmra.mxu0 %v694
  %v734 = vpop.f32.mrf.mxu0
  %v735 = vadd.f32 %v670, %v734
  %736 = vdwg.mxu0
  %737 = vst [vmem:[#allocation3] sm:$0xff] %v714
  %738 = vst [vmem:[#allocation3 + $0x8] sm:$0xff] %v717
  %739 = vst [vmem:[#allocation3 + $0x10] sm:$0xff] %v720
  %740 = vst [vmem:[#allocation3 + $0x18] sm:$0xff] %v723
  %741 = vst [vmem:[#allocation3 + $0x20] sm:$0xff] %v726
  %742 = vst [vmem:[#allocation3 + $0x28] sm:$0xff] %v729
  %743 = vst [vmem:[#allocation3 + $0x30] sm:$0xff] %v732
  %744 = vst [vmem:[#allocation3 + $0x38] sm:$0xff] %v735
  %v745 = vld [vmem:[%s5] sm:$0xff]
  %v746 = vld [vmem:[%s5 + $0x8] sm:$0xff]
  %v747 = vld [vmem:[%s5 + $0x10] sm:$0xff]
  %v748 = vld [vmem:[%s5 + $0x18] sm:$0xff]
  %v749 = vld [vmem:[#allocation3] sm:$0xff]
  %750 = vmatpush.msra.mxu0 0.0
  %751 = vmatpush.msra.mxu0 0.0
  %752 = vmatpush.msra.mxu0 0.0
  %753 = vmatpush.msra.mxu0 0.0
  %754 = vmatpush.msra.mxu0 0.0
  %755 = vmatpush.msra.mxu0 0.0
  %756 = vmatpush.msra.mxu0 0.0
  %757 = vmatpush.msra.mxu0 0.0
  %758 = vmatpush.msra.mxu0 0.0
  %759 = vmatpush.msra.mxu0 0.0
  %760 = vmatpush.msra.mxu0 0.0
  %761 = vmatpush.msra.mxu0 0.0
  %762 = vmatpush.msra.mxu0 %v748
  %763 = vmatpush.msra.mxu0 %v747
  %764 = vmatpush.msra.mxu0 %v746
  %765 = vmatpush.msra.mxu0 %v745
  %766 = vmatmul.f32.gmra.mxu0 %v129
  %v767 = vpop.f32.mrf.mxu0
  %v768 = vadd.f32 0.0, %v767
  %769 = vdwg.mxu0
  %v770 = vadd.f32 %v749, %v768
  %v771 = vxor.u32 %v770, 2147483648
  %v772 = vmul.f32 %v771, 1.442695
  %v773 = vpow.pop %v772
  %v774 = vadd.f32 %v773, 1.0
  %v775 = vrcp.pop %v774
  %v776 = vmul.f32 %v774, %v775
  %v777 = vsub.f32 1.0, %v776
  %v778 = vmul.f32 %v775, %v777
  %v779 = vadd.f32 %v775, %v778
  %vm780 = vweird.f32 %v774
  %vm781 = vweird.f32 %v775
  %vm782 = vmor %vm780, %vm781
  %v783 = vsel %vm782, %v775, %v779
  %v784 = vand.u32 2147483647, %v774
  %vm785 = vcmp.eq.f32.partialorder %v784, 8.507059e+37
  %v786 = vand.u32 %v774, 2147483648
  %v787 = vor.u32 1.1754944e-38, %v786
  %v788 = vsel %vm785, %v787, %v783
  %v789 = vmul.f32 1.0, %v788
  %v790 = vtanh.pop %v770
  %v791 = vmul.f32 %v789, 0.0
  %793 = vrot.lane.b32.xlu0 %v790, 64
  %v794 = vpop.permute.xlu0 %793
  %v796 = vmul.f32 %v789, %v794
  %798 = vrot.lane.b32.xlu0 %v796, 32
  %v799 = vpop.permute.xlu0 %798
  %v801 = vadd.f32 %v791, %v799
  %v802 = vtanh.pop %v801
  %804 = vrot.lane.b32.xlu0 %v802, 64
  %v805 = vpop.permute.xlu0 %804
  %v807 = vmul.f32 %v789, %v805
  %809 = vrot.lane.b32.xlu0 %v807, 32
  %v810 = vpop.permute.xlu0 %809
  %812 = vst.msk [vmem:[#allocation2] sm:$0xff] %vm127, %v810
  %v813 = vld [vmem:[#allocation3 + $0x8] sm:$0xff]
  %v814 = vsel %vm127, %v810, 0
  %816 = vmatpush.msra.mxu0 0.0
  %817 = vmatpush.msra.mxu0 0.0
  %818 = vmatpush.msra.mxu0 0.0
  %819 = vmatpush.msra.mxu0 0.0
  %820 = vmatpush.msra.mxu0 0.0
  %821 = vmatpush.msra.mxu0 0.0
  %822 = vmatpush.msra.mxu0 0.0
  %823 = vmatpush.msra.mxu0 0.0
  %824 = vmatpush.msra.mxu0 0.0
  %825 = vmatpush.msra.mxu0 0.0
  %826 = vmatpush.msra.mxu0 0.0
  %827 = vmatpush.msra.mxu0 0.0
  %828 = vmatpush.msra.mxu0 %v748
  %829 = vmatpush.msra.mxu0 %v747
  %830 = vmatpush.msra.mxu0 %v746
  %831 = vmatpush.msra.mxu0 %v745
  %832 = vmatmul.f32.gmra.mxu0 %v814
  %v833 = vpop.f32.mrf.mxu0
  %v834 = vadd.f32 0.0, %v833
  %835 = vdwg.mxu0
  %v836 = vadd.f32 %v813, %v834
  %v837 = vxor.u32 %v836, 2147483648
  %v838 = vmul.f32 %v837, 1.442695
  %v839 = vpow.pop %v838
  %v840 = vadd.f32 %v839, 1.0
  %v841 = vrcp.pop %v840
  %v842 = vmul.f32 %v840, %v841
  %v843 = vsub.f32 1.0, %v842
  %v844 = vmul.f32 %v841, %v843
  %v845 = vadd.f32 %v841, %v844
  %vm846 = vweird.f32 %v840
  %vm847 = vweird.f32 %v841
  %vm848 = vmor %vm846, %vm847
  %v849 = vsel %vm848, %v841, %v845
  %v850 = vand.u32 2147483647, %v840
  %vm851 = vcmp.eq.f32.partialorder %v850, 8.507059e+37
  %v852 = vand.u32 %v840, 2147483648
  %v853 = vor.u32 1.1754944e-38, %v852
  %v854 = vsel %vm851, %v853, %v849
  %v855 = vmul.f32 1.0, %v854
  %v856 = vtanh.pop %v836
  %v857 = vmul.f32 %v855, %v801
  %859 = vrot.lane.b32.xlu0 %v856, 64
  %v860 = vpop.permute.xlu0 %859
  %v862 = vmul.f32 %v855, %v860
  %864 = vrot.lane.b32.xlu0 %v862, 32
  %v865 = vpop.permute.xlu0 %864
  %v867 = vadd.f32 %v857, %v865
  %v868 = vtanh.pop %v867
  %870 = vrot.lane.b32.xlu0 %v868, 64
  %v871 = vpop.permute.xlu0 %870
  %v873 = vmul.f32 %v855, %v871
  %875 = vrot.lane.b32.xlu0 %v873, 32
  %v876 = vpop.permute.xlu0 %875
  %878 = vst.msk [vmem:[#allocation2 + $0x8] sm:$0xff] %vm127, %v876
  %v879 = vld [vmem:[#allocation3 + $0x10] sm:$0xff]
  %v880 = vsel %vm127, %v876, 0
  %882 = vmatpush.msra.mxu0 0.0
  %883 = vmatpush.msra.mxu0 0.0
  %884 = vmatpush.msra.mxu0 0.0
  %885 = vmatpush.msra.mxu0 0.0
  %886 = vmatpush.msra.mxu0 0.0
  %887 = vmatpush.msra.mxu0 0.0
  %888 = vmatpush.msra.mxu0 0.0
  %889 = vmatpush.msra.mxu0 0.0
  %890 = vmatpush.msra.mxu0 0.0
  %891 = vmatpush.msra.mxu0 0.0
  %892 = vmatpush.msra.mxu0 0.0
  %893 = vmatpush.msra.mxu0 0.0
  %894 = vmatpush.msra.mxu0 %v748
  %895 = vmatpush.msra.mxu0 %v747
  %896 = vmatpush.msra.mxu0 %v746
  %897 = vmatpush.msra.mxu0 %v745
  %898 = vmatmul.f32.gmra.mxu0 %v880
  %v899 = vpop.f32.mrf.mxu0
  %v900 = vadd.f32 0.0, %v899
  %901 = vdwg.mxu0
  %v902 = vadd.f32 %v879, %v900
  %v903 = vxor.u32 %v902, 2147483648
  %v904 = vmul.f32 %v903, 1.442695
  %v905 = vpow.pop %v904
  %v906 = vadd.f32 %v905, 1.0
  %v907 = vrcp.pop %v906
  %v908 = vmul.f32 %v906, %v907
  %v909 = vsub.f32 1.0, %v908
  %v910 = vmul.f32 %v907, %v909
  %v911 = vadd.f32 %v907, %v910
  %vm912 = vweird.f32 %v906
  %vm913 = vweird.f32 %v907
  %vm914 = vmor %vm912, %vm913
  %v915 = vsel %vm914, %v907, %v911
  %v916 = vand.u32 2147483647, %v906
  %vm917 = vcmp.eq.f32.partialorder %v916, 8.507059e+37
  %v918 = vand.u32 %v906, 2147483648
  %v919 = vor.u32 1.1754944e-38, %v918
  %v920 = vsel %vm917, %v919, %v915
  %v921 = vmul.f32 1.0, %v920
  %v922 = vtanh.pop %v902
  %v923 = vmul.f32 %v921, %v867
  %925 = vrot.lane.b32.xlu0 %v922, 64
  %v926 = vpop.permute.xlu0 %925
  %v928 = vmul.f32 %v921, %v926
  %930 = vrot.lane.b32.xlu0 %v928, 32
  %v931 = vpop.permute.xlu0 %930
  %v933 = vadd.f32 %v923, %v931
  %v934 = vtanh.pop %v933
  %936 = vrot.lane.b32.xlu0 %v934, 64
  %v937 = vpop.permute.xlu0 %936
  %v939 = vmul.f32 %v921, %v937
  %941 = vrot.lane.b32.xlu0 %v939, 32
  %v942 = vpop.permute.xlu0 %941
  %944 = vst.msk [vmem:[#allocation2 + $0x10] sm:$0xff] %vm127, %v942
  %v945 = vld [vmem:[#allocation3 + $0x18] sm:$0xff]
  %v946 = vsel %vm127, %v942, 0
  %948 = vmatpush.msra.mxu0 0.0
  %949 = vmatpush.msra.mxu0 0.0
  %950 = vmatpush.msra.mxu0 0.0
  %951 = vmatpush.msra.mxu0 0.0
  %952 = vmatpush.msra.mxu0 0.0
  %953 = vmatpush.msra.mxu0 0.0
  %954 = vmatpush.msra.mxu0 0.0
  %955 = vmatpush.msra.mxu0 0.0
  %956 = vmatpush.msra.mxu0 0.0
  %957 = vmatpush.msra.mxu0 0.0
  %958 = vmatpush.msra.mxu0 0.0
  %959 = vmatpush.msra.mxu0 0.0
  %960 = vmatpush.msra.mxu0 %v748
  %961 = vmatpush.msra.mxu0 %v747
  %962 = vmatpush.msra.mxu0 %v746
  %963 = vmatpush.msra.mxu0 %v745
  %964 = vmatmul.f32.gmra.mxu0 %v946
  %v965 = vpop.f32.mrf.mxu0
  %v966 = vadd.f32 0.0, %v965
  %967 = vdwg.mxu0
  %v968 = vadd.f32 %v945, %v966
  %v969 = vxor.u32 %v968, 2147483648
  %v970 = vmul.f32 %v969, 1.442695
  %v971 = vpow.pop %v970
  %v972 = vadd.f32 %v971, 1.0
  %v973 = vrcp.pop %v972
  %v974 = vmul.f32 %v972, %v973
  %v975 = vsub.f32 1.0, %v974
  %v976 = vmul.f32 %v973, %v975
  %v977 = vadd.f32 %v973, %v976
  %vm978 = vweird.f32 %v972
  %vm979 = vweird.f32 %v973
  %vm980 = vmor %vm978, %vm979
  %v981 = vsel %vm980, %v973, %v977
  %v982 = vand.u32 2147483647, %v972
  %vm983 = vcmp.eq.f32.partialorder %v982, 8.507059e+37
  %v984 = vand.u32 %v972, 2147483648
  %v985 = vor.u32 1.1754944e-38, %v984
  %v986 = vsel %vm983, %v985, %v981
  %v987 = vmul.f32 1.0, %v986
  %v988 = vtanh.pop %v968
  %v989 = vmul.f32 %v987, %v933
  %991 = vrot.lane.b32.xlu0 %v988, 64
  %v992 = vpop.permute.xlu0 %991
  %v994 = vmul.f32 %v987, %v992
  %996 = vrot.lane.b32.xlu0 %v994, 32
  %v997 = vpop.permute.xlu0 %996
  %v999 = vadd.f32 %v989, %v997
  %v1000 = vtanh.pop %v999
  %1002 = vrot.lane.b32.xlu0 %v1000, 64
  %v1003 = vpop.permute.xlu0 %1002
  %v1005 = vmul.f32 %v987, %v1003
  %1007 = vrot.lane.b32.xlu0 %v1005, 32
  %v1008 = vpop.permute.xlu0 %1007
  %1010 = vst.msk [vmem:[#allocation2 + $0x18] sm:$0xff] %vm127, %v1008
  %v1011 = vld [vmem:[#allocation3 + $0x20] sm:$0xff]
  %v1012 = vsel %vm127, %v1008, 0
  %1014 = vmatpush.msra.mxu0 0.0
  %1015 = vmatpush.msra.mxu0 0.0
  %1016 = vmatpush.msra.mxu0 0.0
  %1017 = vmatpush.msra.mxu0 0.0
  %1018 = vmatpush.msra.mxu0 0.0
  %1019 = vmatpush.msra.mxu0 0.0
  %1020 = vmatpush.msra.mxu0 0.0
  %1021 = vmatpush.msra.mxu0 0.0
  %1022 = vmatpush.msra.mxu0 0.0
  %1023 = vmatpush.msra.mxu0 0.0
  %1024 = vmatpush.msra.mxu0 0.0
  %1025 = vmatpush.msra.mxu0 0.0
  %1026 = vmatpush.msra.mxu0 %v748
  %1027 = vmatpush.msra.mxu0 %v747
  %1028 = vmatpush.msra.mxu0 %v746
  %1029 = vmatpush.msra.mxu0 %v745
  %1030 = vmatmul.f32.gmra.mxu0 %v1012
  %v1031 = vpop.f32.mrf.mxu0
  %v1032 = vadd.f32 0.0, %v1031
  %1033 = vdwg.mxu0
  %v1034 = vadd.f32 %v1011, %v1032
  %v1035 = vxor.u32 %v1034, 2147483648
  %v1036 = vmul.f32 %v1035, 1.442695
  %v1037 = vpow.pop %v1036
  %v1038 = vadd.f32 %v1037, 1.0
  %v1039 = vrcp.pop %v1038
  %v1040 = vmul.f32 %v1038, %v1039
  %v1041 = vsub.f32 1.0, %v1040
  %v1042 = vmul.f32 %v1039, %v1041
  %v1043 = vadd.f32 %v1039, %v1042
  %vm1044 = vweird.f32 %v1038
  %vm1045 = vweird.f32 %v1039
  %vm1046 = vmor %vm1044, %vm1045
  %v1047 = vsel %vm1046, %v1039, %v1043
  %v1048 = vand.u32 2147483647, %v1038
  %vm1049 = vcmp.eq.f32.partialorder %v1048, 8.507059e+37
  %v1050 = vand.u32 %v1038, 2147483648
  %v1051 = vor.u32 1.1754944e-38, %v1050
  %v1052 = vsel %vm1049, %v1051, %v1047
  %v1053 = vmul.f32 1.0, %v1052
  %v1054 = vtanh.pop %v1034
  %v1055 = vmul.f32 %v1053, %v999
  %1057 = vrot.lane.b32.xlu0 %v1054, 64
  %v1058 = vpop.permute.xlu0 %1057
  %v1060 = vmul.f32 %v1053, %v1058
  %1062 = vrot.lane.b32.xlu0 %v1060, 32
  %v1063 = vpop.permute.xlu0 %1062
  %v1065 = vadd.f32 %v1055, %v1063
  %v1066 = vtanh.pop %v1065
  %1068 = vrot.lane.b32.xlu0 %v1066, 64
  %v1069 = vpop.permute.xlu0 %1068
  %v1071 = vmul.f32 %v1053, %v1069
  %1073 = vrot.lane.b32.xlu0 %v1071, 32
  %v1074 = vpop.permute.xlu0 %1073
  %1076 = vst.msk [vmem:[#allocation2 + $0x20] sm:$0xff] %vm127, %v1074
  %v1077 = vld [vmem:[#allocation3 + $0x28] sm:$0xff]
  %v1078 = vsel %vm127, %v1074, 0
  %1080 = vmatpush.msra.mxu0 0.0
  %1081 = vmatpush.msra.mxu0 0.0
  %1082 = vmatpush.msra.mxu0 0.0
  %1083 = vmatpush.msra.mxu0 0.0
  %1084 = vmatpush.msra.mxu0 0.0
  %1085 = vmatpush.msra.mxu0 0.0
  %1086 = vmatpush.msra.mxu0 0.0
  %1087 = vmatpush.msra.mxu0 0.0
  %1088 = vmatpush.msra.mxu0 0.0
  %1089 = vmatpush.msra.mxu0 0.0
  %1090 = vmatpush.msra.mxu0 0.0
  %1091 = vmatpush.msra.mxu0 0.0
  %1092 = vmatpush.msra.mxu0 %v748
  %1093 = vmatpush.msra.mxu0 %v747
  %1094 = vmatpush.msra.mxu0 %v746
  %1095 = vmatpush.msra.mxu0 %v745
  %1096 = vmatmul.f32.gmra.mxu0 %v1078
  %v1097 = vpop.f32.mrf.mxu0
  %v1098 = vadd.f32 0.0, %v1097
  %1099 = vdwg.mxu0
  %v1100 = vadd.f32 %v1077, %v1098
  %v1101 = vxor.u32 %v1100, 2147483648
  %v1102 = vmul.f32 %v1101, 1.442695
  %v1103 = vpow.pop %v1102
  %v1104 = vadd.f32 %v1103, 1.0
  %v1105 = vrcp.pop %v1104
  %v1106 = vmul.f32 %v1104, %v1105
  %v1107 = vsub.f32 1.0, %v1106
  %v1108 = vmul.f32 %v1105, %v1107
  %v1109 = vadd.f32 %v1105, %v1108
  %vm1110 = vweird.f32 %v1104
  %vm1111 = vweird.f32 %v1105
  %vm1112 = vmor %vm1110, %vm1111
  %v1113 = vsel %vm1112, %v1105, %v1109
  %v1114 = vand.u32 2147483647, %v1104
  %vm1115 = vcmp.eq.f32.partialorder %v1114, 8.507059e+37
  %v1116 = vand.u32 %v1104, 2147483648
  %v1117 = vor.u32 1.1754944e-38, %v1116
  %v1118 = vsel %vm1115, %v1117, %v1113
  %v1119 = vmul.f32 1.0, %v1118
  %v1120 = vtanh.pop %v1100
  %v1121 = vmul.f32 %v1119, %v1065
  %1123 = vrot.lane.b32.xlu0 %v1120, 64
  %v1124 = vpop.permute.xlu0 %1123
  %v1126 = vmul.f32 %v1119, %v1124
  %1128 = vrot.lane.b32.xlu0 %v1126, 32
  %v1129 = vpop.permute.xlu0 %1128
  %v1131 = vadd.f32 %v1121, %v1129
  %v1132 = vtanh.pop %v1131
  %1134 = vrot.lane.b32.xlu0 %v1132, 64
  %v1135 = vpop.permute.xlu0 %1134
  %v1137 = vmul.f32 %v1119, %v1135
  %1139 = vrot.lane.b32.xlu0 %v1137, 32
  %v1140 = vpop.permute.xlu0 %1139
  %1142 = vst.msk [vmem:[#allocation2 + $0x28] sm:$0xff] %vm127, %v1140
  %v1143 = vld [vmem:[#allocation3 + $0x30] sm:$0xff]
  %v1144 = vsel %vm127, %v1140, 0
  %1146 = vmatpush.msra.mxu0 0.0
  %1147 = vmatpush.msra.mxu0 0.0
  %1148 = vmatpush.msra.mxu0 0.0
  %1149 = vmatpush.msra.mxu0 0.0
  %1150 = vmatpush.msra.mxu0 0.0
  %1151 = vmatpush.msra.mxu0 0.0
  %1152 = vmatpush.msra.mxu0 0.0
  %1153 = vmatpush.msra.mxu0 0.0
  %1154 = vmatpush.msra.mxu0 0.0
  %1155 = vmatpush.msra.mxu0 0.0
  %1156 = vmatpush.msra.mxu0 0.0
  %1157 = vmatpush.msra.mxu0 0.0
  %1158 = vmatpush.msra.mxu0 %v748
  %1159 = vmatpush.msra.mxu0 %v747
  %1160 = vmatpush.msra.mxu0 %v746
  %1161 = vmatpush.msra.mxu0 %v745
  %1162 = vmatmul.f32.gmra.mxu0 %v1144
  %v1163 = vpop.f32.mrf.mxu0
  %v1164 = vadd.f32 0.0, %v1163
  %1165 = vdwg.mxu0
  %v1166 = vadd.f32 %v1143, %v1164
  %v1167 = vxor.u32 %v1166, 2147483648
  %v1168 = vmul.f32 %v1167, 1.442695
  %v1169 = vpow.pop %v1168
  %v1170 = vadd.f32 %v1169, 1.0
  %v1171 = vrcp.pop %v1170
  %v1172 = vmul.f32 %v1170, %v1171
  %v1173 = vsub.f32 1.0, %v1172
  %v1174 = vmul.f32 %v1171, %v1173
  %v1175 = vadd.f32 %v1171, %v1174
  %vm1176 = vweird.f32 %v1170
  %vm1177 = vweird.f32 %v1171
  %vm1178 = vmor %vm1176, %vm1177
  %v1179 = vsel %vm1178, %v1171, %v1175
  %v1180 = vand.u32 2147483647, %v1170
  %vm1181 = vcmp.eq.f32.partialorder %v1180, 8.507059e+37
  %v1182 = vand.u32 %v1170, 2147483648
  %v1183 = vor.u32 1.1754944e-38, %v1182
  %v1184 = vsel %vm1181, %v1183, %v1179
  %v1185 = vmul.f32 1.0, %v1184
  %v1186 = vtanh.pop %v1166
  %v1187 = vmul.f32 %v1185, %v1131
  %1189 = vrot.lane.b32.xlu0 %v1186, 64
  %v1190 = vpop.permute.xlu0 %1189
  %v1192 = vmul.f32 %v1185, %v1190
  %1194 = vrot.lane.b32.xlu0 %v1192, 32
  %v1195 = vpop.permute.xlu0 %1194
  %v1197 = vadd.f32 %v1187, %v1195
  %v1198 = vtanh.pop %v1197
  %1200 = vrot.lane.b32.xlu0 %v1198, 64
  %v1201 = vpop.permute.xlu0 %1200
  %v1203 = vmul.f32 %v1185, %v1201
  %1205 = vrot.lane.b32.xlu0 %v1203, 32
  %v1206 = vpop.permute.xlu0 %1205
  %1208 = vst.msk [vmem:[#allocation2 + $0x30] sm:$0xff] %vm127, %v1206
  %v1209 = vld [vmem:[#allocation3 + $0x38] sm:$0xff]
  %v1210 = vsel %vm127, %v1206, 0
  %1212 = vmatpush.msra.mxu0 0.0
  %1213 = vmatpush.msra.mxu0 0.0
  %1214 = vmatpush.msra.mxu0 0.0
  %1215 = vmatpush.msra.mxu0 0.0
  %1216 = vmatpush.msra.mxu0 0.0
  %1217 = vmatpush.msra.mxu0 0.0
  %1218 = vmatpush.msra.mxu0 0.0
  %1219 = vmatpush.msra.mxu0 0.0
  %1220 = vmatpush.msra.mxu0 0.0
  %1221 = vmatpush.msra.mxu0 0.0
  %1222 = vmatpush.msra.mxu0 0.0
  %1223 = vmatpush.msra.mxu0 0.0
  %1224 = vmatpush.msra.mxu0 %v748
  %1225 = vmatpush.msra.mxu0 %v747
  %1226 = vmatpush.msra.mxu0 %v746
  %1227 = vmatpush.msra.mxu0 %v745
  %1228 = vmatmul.f32.gmra.mxu0 %v1210
  %v1229 = vpop.f32.mrf.mxu0
  %v1230 = vadd.f32 0.0, %v1229
  %1231 = vdwg.mxu0
  %v1232 = vadd.f32 %v1209, %v1230
  %v1233 = vxor.u32 %v1232, 2147483648
  %v1234 = vmul.f32 %v1233, 1.442695
  %v1235 = vpow.pop %v1234
  %v1236 = vadd.f32 %v1235, 1.0
  %v1237 = vrcp.pop %v1236
  %v1238 = vmul.f32 %v1236, %v1237
  %v1239 = vsub.f32 1.0, %v1238
  %v1240 = vmul.f32 %v1237, %v1239
  %v1241 = vadd.f32 %v1237, %v1240
  %vm1242 = vweird.f32 %v1236
  %vm1243 = vweird.f32 %v1237
  %vm1244 = vmor %vm1242, %vm1243
  %v1245 = vsel %vm1244, %v1237, %v1241
  %v1246 = vand.u32 2147483647, %v1236
  %vm1247 = vcmp.eq.f32.partialorder %v1246, 8.507059e+37
  %v1248 = vand.u32 %v1236, 2147483648
  %v1249 = vor.u32 1.1754944e-38, %v1248
  %v1250 = vsel %vm1247, %v1249, %v1245
  %v1251 = vmul.f32 1.0, %v1250
  %v1252 = vtanh.pop %v1232
  %v1253 = vmul.f32 %v1251, %v1197
  %1255 = vrot.lane.b32.xlu0 %v1252, 64
  %v1256 = vpop.permute.xlu0 %1255
  %v1258 = vmul.f32 %v1251, %v1256
  %1260 = vrot.lane.b32.xlu0 %v1258, 32
  %v1261 = vpop.permute.xlu0 %1260
  %v1263 = vadd.f32 %v1253, %v1261
  %v1264 = vtanh.pop %v1263
  %1266 = vrot.lane.b32.xlu0 %v1264, 64
  %v1267 = vpop.permute.xlu0 %1266
  %v1269 = vmul.f32 %v1251, %v1267
  %1271 = vrot.lane.b32.xlu0 %v1269, 32
  %v1272 = vpop.permute.xlu0 %1271
  %1274 = vst.msk [vmem:[#allocation2 + $0x38] sm:$0xff] %vm127, %v1272
  %v1275 = vld [vmem:[#allocation2] sm:$0xff]
  %v1276 = vld [vmem:[#allocation2 + $0x8] sm:$0xff]
  %v1277 = vld [vmem:[#allocation2 + $0x10] sm:$0xff]
  %v1278 = vld [vmem:[#allocation2 + $0x18] sm:$0xff]
  %v1279 = vld [vmem:[#allocation2 + $0x20] sm:$0xff]
  %v1280 = vld [vmem:[#allocation2 + $0x28] sm:$0xff]
  %v1281 = vld [vmem:[#allocation2 + $0x30] sm:$0xff]
  %v1282 = vld [vmem:[#allocation2 + $0x38] sm:$0xff]
  %v1283 = vld [vmem:[%s7] sm:$0x1]
  %v1285 = vperm.slane %v1283, 0
  %v1287 = vmul.f32 %v1275, %v1285
  %v1288 = vmul.f32 %v1276, %v1285
  %v1289 = vmul.f32 %v1277, %v1285
  %v1290 = vmul.f32 %v1278, %v1285
  %v1291 = vmul.f32 %v1279, %v1285
  %v1292 = vmul.f32 %v1280, %v1285
  %v1293 = vmul.f32 %v1281, %v1285
  %v1294 = vmul.f32 %v1282, %v1285
  %v1295 = vsel %vm127, %v1287, 0.0
  %1296 = vadd.xlane.f32.xlu0 %v1295
  %v1297 = vpop.xlane.xlu0 %1296
  %v1298 = vsel %vm127, %v1288, 0.0
  %1299 = vadd.xlane.f32.xlu0 %v1298
  %v1300 = vpop.xlane.xlu0 %1299
  %v1301 = vsel %vm127, %v1289, 0.0
  %1302 = vadd.xlane.f32.xlu0 %v1301
  %v1303 = vpop.xlane.xlu0 %1302
  %v1304 = vsel %vm127, %v1290, 0.0
  %1305 = vadd.xlane.f32.xlu0 %v1304
  %v1306 = vpop.xlane.xlu0 %1305
  %v1307 = vsel %vm127, %v1291, 0.0
  %1308 = vadd.xlane.f32.xlu0 %v1307
  %v1309 = vpop.xlane.xlu0 %1308
  %v1310 = vsel %vm127, %v1292, 0.0
  %1311 = vadd.xlane.f32.xlu0 %v1310
  %v1312 = vpop.xlane.xlu0 %1311
  %v1313 = vsel %vm127, %v1293, 0.0
  %1314 = vadd.xlane.f32.xlu0 %v1313
  %v1315 = vpop.xlane.xlu0 %1314
  %v1316 = vsel %vm127, %v1294, 0.0
  %1317 = vadd.xlane.f32.xlu0 %v1316
  %v1318 = vpop.xlane.xlu0 %1317
  %v1319 = vld [vmem:[#allocation4] sm:$0x1]
  %v1321 = vperm.slane %v1319, 0
  %v1323 = vadd.f32 %v1297, %v1321
  %v1324 = vadd.f32 %v1300, %v1321
  %v1325 = vadd.f32 %v1303, %v1321
  %v1326 = vadd.f32 %v1306, %v1321
  %v1327 = vadd.f32 %v1309, %v1321
  %v1328 = vadd.f32 %v1312, %v1321
  %v1329 = vadd.f32 %v1315, %v1321
  %v1330 = vadd.f32 %v1318, %v1321
  %vm1331 = vcmask 7168
  %1332 = vst.msk [vmem:[%s9] sm:$0xff] %vm1331, %v1323
  %1333 = vst.msk [vmem:[%s9 + $0x8] sm:$0xff] %vm1331, %v1324
  %1334 = vst.msk [vmem:[%s9 + $0x10] sm:$0xff] %vm1331, %v1325
  %1335 = vst.msk [vmem:[%s9 + $0x18] sm:$0xff] %vm1331, %v1326
  %1336 = vst.msk [vmem:[%s9 + $0x20] sm:$0xff] %vm1331, %v1327
  %1337 = vst.msk [vmem:[%s9 + $0x28] sm:$0xff] %vm1331, %v1328
  %1338 = vst.msk [vmem:[%s9 + $0x30] sm:$0xff] %vm1331, %v1329
  %1339 = vst.msk [vmem:[%s9 + $0x38] sm:$0xff] %vm1331, %v1330
  // Predicated region
  $region38: #{lstm_model_forward.1} parent=0 // pred_check
    _
  $region39: #{lstm_model_forward.1} parent=0 // pred_check_branch
    %1341 = sbr.rel (0) target = $region41
  $region40: #{lstm_model_forward.1} parent=0 // pred_region
    _
  $region41: #{lstm_model_forward.1} parent=0 // pred_fallthru
    _
  // Predicated region
  $region42: #{lstm_model_forward.1} parent=0 // pred_check
    _
  $region43: #{lstm_model_forward.1} parent=0 // pred_check_branch
    %1343 = sbr.rel (0) target = $region45
  $region44: #{lstm_model_forward.1} parent=0 // pred_region
    _
  $region45: #{lstm_model_forward.1} parent=0 // pred_fallthru
    _

</llo_original>
